<compile_context>
chip_gen: v7x
topology: tpu7x:2x2x1
jax: 0.10.0
libtpu: 0.0.40
codegen_flags: <defaults>
</compile_context>

<pallas_src>
import functools

import jax
import jax.numpy as jnp
from jax import lax
from jax.experimental import pallas as pl
from jax.experimental.pallas import tpu as pltpu


# ----------------------------------------------------------------------------
# small host-side helpers (one-time parameter preprocessing)
# ----------------------------------------------------------------------------
def _bn_affine(gamma, beta, rmean, rvar, eps=1e-5):
    scale = gamma / jnp.sqrt(rvar + eps)
    shift = beta - rmean * scale
    return scale, shift


# ----------------------------------------------------------------------------
# Parameters: PyTorch-layout init (mirrors AAE.__init__)
# ----------------------------------------------------------------------------
def init_params(key, input_size, input_channels, encoding_dims, step_channels,
                classes):
    keys = iter(jax.random.split(key, 64))
    nk = lambda: next(keys)  # noqa: E731

    def w_init(shape, s=0.05):
        return (s * jax.random.normal(nk(), shape)).astype(jnp.float32)

    def b_init(n):
        return (0.01 * jax.random.normal(nk(), (n,))).astype(jnp.float32)

    def bn_init(n):
        gamma = 1.0 + 0.05 * jax.random.normal(nk(), (n,))
        beta = 0.02 * jax.random.normal(nk(), (n,))
        rmean = 0.01 * jax.random.normal(nk(), (n,))
        rvar = 1.0 + 0.1 * jnp.abs(jax.random.normal(nk(), (n,)))
        return tuple(a.astype(jnp.float32) for a in (gamma, beta, rmean, rvar))

    params = {}

    # encoder: Conv(in, step, 5, 2, 2)+LReLU, then Conv(ch, 4ch, 5, 4, 2)+BN+LReLU
    enc = [{"w": w_init((step_channels, input_channels, 5, 5)),
            "b": b_init(step_channels), "bn": None, "stride": 2, "pad": 2}]
    size, ch = input_size // 2, step_channels
    while size > 1:
        enc.append({"w": w_init((ch * 4, ch, 5, 5)), "b": b_init(ch * 4),
                    "bn": bn_init(ch * 4), "stride": 4, "pad": 2})
        ch *= 4
        size //= 4
    params["encoder"] = enc
    params["encoder_fc"] = {"w": w_init((encoding_dims, ch)), "b": b_init(encoding_dims)}
    params["bn_lin"] = bn_init(encoding_dims)
    params["decoder_fc"] = {"w": w_init((step_channels, encoding_dims)),
                            "b": b_init(step_channels)}

    # decoder: ConvT(ch, 4ch, 5, 4, 2, 3)+BN+LReLU ..., final ConvT(ch, in, 5, 2, 2, 1)
    dec = []
    size, ch = 1, step_channels
    while size < input_size // 2:
        dec.append({"w": w_init((ch, ch * 4, 5, 5)), "b": b_init(ch * 4),
                    "bn": bn_init(ch * 4), "stride": 4, "pad": 2, "out_pad": 3})
        ch *= 4
        size *= 4
    dec.append({"w": w_init((ch, input_channels, 5, 5)), "b": b_init(input_channels),
                "bn": None, "stride": 2, "pad": 2, "out_pad": 1})
    params["decoder"] = dec

    params["linear"] = {"w": w_init((classes, encoding_dims)), "b": b_init(classes)}
    params["fc_crit1"] = {"w": w_init((64, encoding_dims * 2)), "b": b_init(64)}
    params["fc_crit2"] = {"w": w_init((16, 64)), "b": b_init(16)}
    params["fc_crit3"] = {"w": w_init((1, 16)), "b": b_init(1)}
    return params


# ----------------------------------------------------------------------------
# One-time preprocessing: conv layers -> dense operators, fold bias + BN,
# cast MXU operands to bf16.  All heavy lifting happens here, never per-forward.
# ----------------------------------------------------------------------------
def prepare_params(params, input_size, input_channels):
    prep = {}

    def ones_zeros(n):
        return jnp.ones((n,), jnp.float32), jnp.zeros((n,), jnp.float32)

    def fold_cols(op, cout, ohw, b, bn):
        """Fold per-output-channel bias + inference BN into a dense operator
        whose output axis is NCHW-flattened (channel-major, repeat over HW)."""
        scale, sh = _bn_affine(*bn) if bn is not None else ones_zeros(cout)
        op = op * jnp.repeat(scale, ohw)[None, :]
        shift = jnp.repeat(b * scale + sh, ohw).reshape(1, -1)
        return op.astype(jnp.bfloat16), shift.astype(jnp.float32)

    def conv_operator(w_oihw, in_chw, stride, pad):
        """Dense operator of Conv2d on a flattened-NCHW input (identity-basis)."""
        cin, H, W = in_chw
        n_in = cin * H * W
        basis = jnp.eye(n_in, dtype=jnp.float32).reshape(n_in, cin, H, W)
        out = lax.conv_general_dilated(
            basis, w_oihw, window_strides=(stride, stride),
            padding=[(pad, pad), (pad, pad)],
            dimension_numbers=("NCHW", "OIHW", "NCHW"))
        cout, OH, OW = out.shape[1:]
        return out.reshape(n_in, cout * OH * OW), (cout, OH, OW)

    def convT_operator(w_iohw, in_chw, stride, pad, out_pad):
        """Dense operator of ConvTranspose2d (PyTorch semantics) via the
        flipped-kernel / lhs-dilated equivalent convolution."""
        cin, H, W = in_chw
        k = w_iohw.shape[2]
        w_conv = jnp.flip(w_iohw, axis=(2, 3)).transpose(1, 0, 2, 3)  # (Cout,Cin,k,k)
        n_in = cin * H * W
        basis = jnp.eye(n_in, dtype=jnp.float32).reshape(n_in, cin, H, W)
        out = lax.conv_general_dilated(
            basis, w_conv, window_strides=(1, 1),
            padding=[(k - 1 - pad, k - 1 - pad + out_pad)] * 2,
            lhs_dilation=(stride, stride),
            dimension_numbers=("NCHW", "OIHW", "NCHW"))
        cout, OH, OW = out.shape[1:]
        return out.reshape(n_in, cout * OH * OW), (cout, OH, OW)

    def fold_dense(w_t, b, bn=None):
        n = w_t.shape[0]
        scale, sh = _bn_affine(*bn) if bn is not None else ones_zeros(n)
        w = w_t.T * scale[None, :]
        shift = (b * scale + sh).reshape(1, n)
        return w.astype(jnp.bfloat16), shift.astype(jnp.float32)

    # encoder conv stack
    shape = (input_channels, input_size, input_size)
    enc = []
    for layer in params["encoder"]:
        op, (cout, OH, OW) = conv_operator(layer["w"], shape, layer["stride"], layer["pad"])
        enc.append(fold_cols(op, cout, OH * OW, layer["b"], layer["bn"]))
        shape = (cout, OH, OW)
    prep["encoder"] = enc

    # encoder_fc + bn_lin (ReLU applied in-kernel); decoder_fc; classifier
    prep["encoder_fc"] = fold_dense(params["encoder_fc"]["w"],
                                    params["encoder_fc"]["b"], params["bn_lin"])
    prep["decoder_fc"] = fold_dense(params["decoder_fc"]["w"], params["decoder_fc"]["b"])
    prep["linear"] = fold_dense(params["linear"]["w"], params["linear"]["b"])

    # decoder conv-transpose stack (input is decoder_fc output viewed as (C,1,1))
    shape = (params["decoder_fc"]["w"].shape[0], 1, 1)
    dec = []
    for layer in params["decoder"]:
        op, (cout, OH, OW) = convT_operator(layer["w"], shape, layer["stride"],
                                            layer["pad"], layer["out_pad"])
        dec.append(fold_cols(op, cout, OH * OW, layer["b"], layer["bn"]))
        shape = (cout, OH, OW)
    prep["decoder"] = dec
    prep["out_chw"] = shape

    # latent critic: split fc_crit1 into mu / std halves (no lane concat in-kernel)
    W1 = params["fc_crit1"]["w"]
    D = W1.shape[1] // 2
    prep["critic"] = {
        "w1m": W1[:, :D].T.astype(jnp.float32),
        "w1s": W1[:, D:].T.astype(jnp.float32),
        "b1": params["fc_crit1"]["b"].reshape(1, -1).astype(jnp.float32),
        "w2": params["fc_crit2"]["w"].T.astype(jnp.float32),
        "b2": params["fc_crit2"]["b"].reshape(1, -1).astype(jnp.float32),
        "w3": params["fc_crit3"]["w"].T.astype(jnp.float32),
        "b3": params["fc_crit3"]["b"].reshape(1, -1).astype(jnp.float32),
    }
    prep["encoding_dims"] = params["encoder_fc"]["w"].shape[0]
    return prep


# ----------------------------------------------------------------------------
# The single fused Pallas kernel: the entire AAE forward in one launch.
# ----------------------------------------------------------------------------
def _make_aae_kernel(n_enc, n_dec, batch, alpha=0.2):
    def kernel(*refs):
        it = iter(refs)
        # ---- inputs ----
        x_ref = next(it)
        z_ref = next(it)
        enc_refs = [(next(it), next(it)) for _ in range(n_enc)]
        ef_w, ef_s = next(it), next(it)
        dfc_w, dfc_s = next(it), next(it)
        cls_w, cls_s = next(it), next(it)
        dec_refs = [(next(it), next(it)) for _ in range(n_dec)]
        w1m = next(it); w1s = next(it); b1 = next(it)
        w2 = next(it); b2 = next(it); w3 = next(it); b3 = next(it)
        # ---- outputs ----
        labels_ref = next(it)
        dec_out_ref = next(it)
        zi_ref = next(it)
        ganf_ref = next(it)
        ganr_ref = next(it)

        f32 = jnp.float32
        bf16 = jnp.bfloat16

        def leaky(v):                          # LeakyReLU(0.2), alpha > 0
            return jnp.maximum(v, alpha * v)

        def mm(a, w_ref, s_ref):               # bf16 MXU operands, f32 accumulate
            return jnp.dot(a.astype(bf16), w_ref[...],
                           preferred_element_type=f32) + s_ref[...]

        # ---- encoder (dense conv operators, bias+BN pre-folded) ----
        h = x_ref[...]
        for w_ref, s_ref in enc_refs:
            h = leaky(mm(h, w_ref, s_ref))

        # ---- zi = relu(bn_lin(encoder_fc(flatten(features)))) ----
        zi = jnp.maximum(mm(h, ef_w, ef_s), 0.0)
        zi_ref[...] = zi

        # ---- classification head and decoder_fc both consume zi ----
        labels_ref[...] = mm(zi, cls_w, cls_s)
        h = mm(zi, dfc_w, dfc_s)

        # ---- decoder (dense ConvTranspose operators); last layer: no BN/act ----
        for li, (w_ref, s_ref) in enumerate(dec_refs):
            h = mm(h, w_ref, s_ref)
            if li < n_dec - 1:
                h = leaky(h)
        dec_out_ref[...] = h

        # ---- latent critic, fake (zi) + real (z) batched as 2-row matmuls ----
        def stats(v):
            mu = jnp.mean(v, axis=0, keepdims=True)
            var = jnp.sum((v - mu) ** 2, axis=0, keepdims=True) / max(batch - 1, 1)
            return mu, jnp.sqrt(var)           # unbiased std (torch.std default)

        mu_f, sd_f = stats(zi)
        mu_r, sd_r = stats(z_ref[...])
        mus = jnp.concatenate([mu_f, mu_r], axis=0)      # (2, D)
        sds = jnp.concatenate([sd_f, sd_r], axis=0)      # (2, D)
        # hstack(mu, sd) @ W1.T == mu @ W1m + sd @ W1s  (no lane-axis concat)
        hc = leaky(jnp.dot(mus, w1m[...], preferred_element_type=f32)
                   + jnp.dot(sds, w1s[...], preferred_element_type=f32) + b1[...])
        hc = leaky(jnp.dot(hc, w2[...], preferred_element_type=f32) + b2[...])
        y = jnp.dot(hc, w3[...], preferred_element_type=f32) + b3[...]
        # exact sigmoid: exp on EUP + full-precision reciprocal
        g = pl.reciprocal(1.0 + jnp.exp(-y), approx=False)
        ganf_ref[...] = g[0:1, :]
        ganr_ref[...] = g[1:2, :]

    return kernel


# ----------------------------------------------------------------------------
# Forward pass (mirrors AAE.forward + AAE.latent_gan) — one pallas_call.
# ----------------------------------------------------------------------------
def aae_forward(prep, x_nchw, z_key):
    B = x_nchw.shape[0]
    C, H, W = prep["out_chw"]
    D = prep["encoding_dims"]

    # Only XLA glue left: a free NCHW flatten + a tiny bf16 cast, and the
    # randn_like(zi) sample for the "real" critic branch.
    x_flat = x_nchw.reshape(B, -1).astype(jnp.bfloat16)
    z = jax.random.normal(z_key, (B, D), dtype=jnp.float32)

    enc, dec, cr = prep["encoder"], prep["decoder"], prep["critic"]
    inputs = [x_flat, z]
    for w, s in enc:
        inputs += [w, s]
    inputs += [*prep["encoder_fc"], *prep["decoder_fc"], *prep["linear"]]
    for w, s in dec:
        inputs += [w, s]
    inputs += [cr["w1m"], cr["w1s"], cr["b1"], cr["w2"], cr["b2"], cr["w3"], cr["b3"]]

    classes = prep["linear"][0].shape[1]
    out_shape = (
        jax.ShapeDtypeStruct((B, classes), jnp.float32),       # labels
        jax.ShapeDtypeStruct((B, C * H * W), jnp.float32),     # decoder output (flat NCHW)
        jax.ShapeDtypeStruct((B, D), jnp.float32),             # zi
        jax.ShapeDtypeStruct((1, 1), jnp.float32),             # gan_fake
        jax.ShapeDtypeStruct((1, 1), jnp.float32),             # gan_real
    )

    # Everything (weights + activations) fits in VMEM (~1 MiB), so the whole
    # network runs as a single block: no grid, whole-array VMEM BlockSpecs.
    vmem = pl.BlockSpec(memory_space=pltpu.MemorySpace.VMEM)
    kernel = _make_aae_kernel(len(enc), len(dec), batch=B)

    labels, dec_flat, zi, gan_fake, gan_real = pl.pallas_call(
        kernel,
        out_shape=out_shape,
        in_specs=[vmem] * len(inputs),
        out_specs=tuple([vmem] * len(out_shape)),
    )(*inputs)

    decoder_output = dec_flat.reshape(B, C, H, W)              # already NCHW order
    return labels, decoder_output, zi, gan_fake, gan_real


# ----------------------------------------------------------------------------
if __name__ == "__main__":
    key = jax.random.PRNGKey(0)
    k_param, k_x, k_z = jax.random.split(key, 3)

    # AAE(input_size=8, input_channels=4, encoding_dims=32, step_channels=16, classes=2)
    input_size, input_channels = 8, 4
    encoding_dims, step_channels, classes = 32, 16, 2
    batch = 4

    params = init_params(k_param, input_size, input_channels, encoding_dims,
                         step_channels, classes)
    prep = prepare_params(params, input_size, input_channels)
    x = jax.random.normal(k_x, (batch, input_channels, input_size, input_size),
                          dtype=jnp.float32)

    fwd = jax.jit(functools.partial(aae_forward, prep))
    labels, dec_out, zi, gan_fake, gan_real = fwd(x, k_z)
    jax.block_until_ready((labels, dec_out, zi, gan_fake, gan_real))

    assert labels.shape == (batch, classes)
    assert dec_out.shape == (batch, input_channels, input_size, input_size)
    assert zi.shape == (batch, encoding_dims)
    assert gan_fake.shape == (1, 1) and gan_real.shape == (1, 1)
    assert bool(jnp.all(jnp.isfinite(labels)))
    assert bool(jnp.all(jnp.isfinite(dec_out)))
    assert bool(jnp.all(jnp.isfinite(zi)))
    assert bool(jnp.all((gan_fake > 0) & (gan_fake < 1)))
    assert bool(jnp.all((gan_real > 0) & (gan_real < 1)))
    print("KERNEL_OK")
</pallas_src>

<mosaic_0001>
module attributes {stable_mosaic.version = 11 : i64} {
  func.func @kernel(%arg0: memref<4x256xbf16, #tpu.memory_space<vmem>>, %arg1: memref<4x32xf32, #tpu.memory_space<vmem>>, %arg2: memref<256x256xbf16, #tpu.memory_space<vmem>>, %arg3: memref<1x256xf32, #tpu.memory_space<vmem>>, %arg4: memref<256x64xbf16, #tpu.memory_space<vmem>>, %arg5: memref<1x64xf32, #tpu.memory_space<vmem>>, %arg6: memref<64x32xbf16, #tpu.memory_space<vmem>>, %arg7: memref<1x32xf32, #tpu.memory_space<vmem>>, %arg8: memref<32x16xbf16, #tpu.memory_space<vmem>>, %arg9: memref<1x16xf32, #tpu.memory_space<vmem>>, %arg10: memref<32x2xbf16, #tpu.memory_space<vmem>>, %arg11: memref<1x2xf32, #tpu.memory_space<vmem>>, %arg12: memref<16x1024xbf16, #tpu.memory_space<vmem>>, %arg13: memref<1x1024xf32, #tpu.memory_space<vmem>>, %arg14: memref<1024x256xbf16, #tpu.memory_space<vmem>>, %arg15: memref<1x256xf32, #tpu.memory_space<vmem>>, %arg16: memref<32x64xf32, #tpu.memory_space<vmem>>, %arg17: memref<32x64xf32, #tpu.memory_space<vmem>>, %arg18: memref<1x64xf32, #tpu.memory_space<vmem>>, %arg19: memref<64x16xf32, #tpu.memory_space<vmem>>, %arg20: memref<1x16xf32, #tpu.memory_space<vmem>>, %arg21: memref<16x1xf32, #tpu.memory_space<vmem>>, %arg22: memref<1x1xf32, #tpu.memory_space<vmem>>, %arg23: memref<4x2xf32, #tpu.memory_space<vmem>>, %arg24: memref<4x256xf32, #tpu.memory_space<vmem>>, %arg25: memref<4x32xf32, #tpu.memory_space<vmem>>, %arg26: memref<1x1xf32, #tpu.memory_space<vmem>>, %arg27: memref<1x1xf32, #tpu.memory_space<vmem>>) attributes {dimension_semantics = [], scalar_prefetch = 0 : i64, scratch_operands = 0 : i64, tpu.core_type = #tpu.core_type<tc>} {
    %c0 = arith.constant 0 : index
    %c0_0 = arith.constant 0 : index
    %0 = vector.load %arg0[%c0, %c0_0] : memref<4x256xbf16, #tpu.memory_space<vmem>>, vector<4x256xbf16>
    %c0_1 = arith.constant 0 : index
    %c0_2 = arith.constant 0 : index
    %1 = vector.load %arg2[%c0_1, %c0_2] : memref<256x256xbf16, #tpu.memory_space<vmem>>, vector<256x256xbf16>
    %cst = arith.constant dense<0.000000e+00> : vector<4x256xf32>
    %2 = tpu.matmul %0, %1, %cst {dimension_numbers = #tpu.dot_dimension_numbers<[1], [0], [0], [1], [0, 0, 1, 1], [], []>} : vector<4x256xbf16>, vector<256x256xbf16>, vector<4x256xf32> -> vector<4x256xf32>
    %c0_3 = arith.constant 0 : index
    %c0_4 = arith.constant 0 : index
    %3 = vector.load %arg3[%c0_3, %c0_4] : memref<1x256xf32, #tpu.memory_space<vmem>>, vector<1x256xf32>
    %4 = vector.broadcast %3 : vector<1x256xf32> to vector<4x256xf32>
    %5 = arith.addf %2, %4 : vector<4x256xf32>
    %cst_5 = arith.constant 2.000000e-01 : f32
    %6 = vector.broadcast %cst_5 : f32 to vector<4x256xf32>
    %7 = arith.mulf %6, %5 : vector<4x256xf32>
    %8 = arith.maximumf %5, %7 : vector<4x256xf32>
    %9 = arith.truncf %8 : vector<4x256xf32> to vector<4x256xbf16>
    %c0_6 = arith.constant 0 : index
    %c0_7 = arith.constant 0 : index
    %10 = vector.load %arg4[%c0_6, %c0_7] : memref<256x64xbf16, #tpu.memory_space<vmem>>, vector<256x64xbf16>
    %cst_8 = arith.constant dense<0.000000e+00> : vector<4x64xf32>
    %11 = tpu.matmul %9, %10, %cst_8 {dimension_numbers = #tpu.dot_dimension_numbers<[1], [0], [0], [1], [0, 0, 1, 1], [], []>} : vector<4x256xbf16>, vector<256x64xbf16>, vector<4x64xf32> -> vector<4x64xf32>
    %c0_9 = arith.constant 0 : index
    %c0_10 = arith.constant 0 : index
    %12 = vector.load %arg5[%c0_9, %c0_10] : memref<1x64xf32, #tpu.memory_space<vmem>>, vector<1x64xf32>
    %13 = vector.broadcast %12 : vector<1x64xf32> to vector<4x64xf32>
    %14 = arith.addf %11, %13 : vector<4x64xf32>
    %cst_11 = arith.constant 2.000000e-01 : f32
    %15 = vector.broadcast %cst_11 : f32 to vector<4x64xf32>
    %16 = arith.mulf %15, %14 : vector<4x64xf32>
    %17 = arith.maximumf %14, %16 : vector<4x64xf32>
    %18 = arith.truncf %17 : vector<4x64xf32> to vector<4x64xbf16>
    %c0_12 = arith.constant 0 : index
    %c0_13 = arith.constant 0 : index
    %19 = vector.load %arg6[%c0_12, %c0_13] : memref<64x32xbf16, #tpu.memory_space<vmem>>, vector<64x32xbf16>
    %cst_14 = arith.constant dense<0.000000e+00> : vector<4x32xf32>
    %20 = tpu.matmul %18, %19, %cst_14 {dimension_numbers = #tpu.dot_dimension_numbers<[1], [0], [0], [1], [0, 0, 1, 1], [], []>} : vector<4x64xbf16>, vector<64x32xbf16>, vector<4x32xf32> -> vector<4x32xf32>
    %c0_15 = arith.constant 0 : index
    %c0_16 = arith.constant 0 : index
    %21 = vector.load %arg7[%c0_15, %c0_16] : memref<1x32xf32, #tpu.memory_space<vmem>>, vector<1x32xf32>
    %22 = vector.broadcast %21 : vector<1x32xf32> to vector<4x32xf32>
    %23 = arith.addf %20, %22 : vector<4x32xf32>
    %cst_17 = arith.constant 0.000000e+00 : f32
    %24 = vector.broadcast %cst_17 : f32 to vector<4x32xf32>
    %25 = arith.maximumf %23, %24 : vector<4x32xf32>
    %c0_18 = arith.constant 0 : index
    %c0_19 = arith.constant 0 : index
    %26 = vector.load %arg25[%c0_18, %c0_19] : memref<4x32xf32, #tpu.memory_space<vmem>>, vector<4x32xf32>
    tpu.vector_store %arg25[%c0_18, %c0_19], %25 {strides = array<i32>} : memref<4x32xf32, #tpu.memory_space<vmem>>, vector<4x32xf32>,
    %27 = arith.truncf %25 : vector<4x32xf32> to vector<4x32xbf16>
    %c0_20 = arith.constant 0 : index
    %c0_21 = arith.constant 0 : index
    %28 = vector.load %arg10[%c0_20, %c0_21] : memref<32x2xbf16, #tpu.memory_space<vmem>>, vector<32x2xbf16>
    %cst_22 = arith.constant dense<0.000000e+00> : vector<4x2xf32>
    %29 = tpu.matmul %27, %28, %cst_22 {dimension_numbers = #tpu.dot_dimension_numbers<[1], [0], [0], [1], [0, 0, 1, 1], [], []>} : vector<4x32xbf16>, vector<32x2xbf16>, vector<4x2xf32> -> vector<4x2xf32>
    %c0_23 = arith.constant 0 : index
    %c0_24 = arith.constant 0 : index
    %30 = vector.load %arg11[%c0_23, %c0_24] : memref<1x2xf32, #tpu.memory_space<vmem>>, vector<1x2xf32>
    %31 = vector.broadcast %30 : vector<1x2xf32> to vector<4x2xf32>
    %32 = arith.addf %29, %31 : vector<4x2xf32>
    %c0_25 = arith.constant 0 : index
    %c0_26 = arith.constant 0 : index
    %33 = vector.load %arg23[%c0_25, %c0_26] : memref<4x2xf32, #tpu.memory_space<vmem>>, vector<4x2xf32>
    tpu.vector_store %arg23[%c0_25, %c0_26], %32 {strides = array<i32>} : memref<4x2xf32, #tpu.memory_space<vmem>>, vector<4x2xf32>,
    %34 = arith.truncf %25 : vector<4x32xf32> to vector<4x32xbf16>
    %c0_27 = arith.constant 0 : index
    %c0_28 = arith.constant 0 : index
    %35 = vector.load %arg8[%c0_27, %c0_28] : memref<32x16xbf16, #tpu.memory_space<vmem>>, vector<32x16xbf16>
    %cst_29 = arith.constant dense<0.000000e+00> : vector<4x16xf32>
    %36 = tpu.matmul %34, %35, %cst_29 {dimension_numbers = #tpu.dot_dimension_numbers<[1], [0], [0], [1], [0, 0, 1, 1], [], []>} : vector<4x32xbf16>, vector<32x16xbf16>, vector<4x16xf32> -> vector<4x16xf32>
    %c0_30 = arith.constant 0 : index
    %c0_31 = arith.constant 0 : index
    %37 = vector.load %arg9[%c0_30, %c0_31] : memref<1x16xf32, #tpu.memory_space<vmem>>, vector<1x16xf32>
    %38 = vector.broadcast %37 : vector<1x16xf32> to vector<4x16xf32>
    %39 = arith.addf %36, %38 : vector<4x16xf32>
    %40 = arith.truncf %39 : vector<4x16xf32> to vector<4x16xbf16>
    %c0_32 = arith.constant 0 : index
    %c0_33 = arith.constant 0 : index
    %41 = vector.load %arg12[%c0_32, %c0_33] : memref<16x1024xbf16, #tpu.memory_space<vmem>>, vector<16x1024xbf16>
    %cst_34 = arith.constant dense<0.000000e+00> : vector<4x1024xf32>
    %42 = tpu.matmul %40, %41, %cst_34 {dimension_numbers = #tpu.dot_dimension_numbers<[1], [0], [0], [1], [0, 0, 1, 1], [], []>} : vector<4x16xbf16>, vector<16x1024xbf16>, vector<4x1024xf32> -> vector<4x1024xf32>
    %c0_35 = arith.constant 0 : index
    %c0_36 = arith.constant 0 : index
    %43 = vector.load %arg13[%c0_35, %c0_36] : memref<1x1024xf32, #tpu.memory_space<vmem>>, vector<1x1024xf32>
    %44 = vector.broadcast %43 : vector<1x1024xf32> to vector<4x1024xf32>
    %45 = arith.addf %42, %44 : vector<4x1024xf32>
    %cst_37 = arith.constant 2.000000e-01 : f32
    %46 = vector.broadcast %cst_37 : f32 to vector<4x1024xf32>
    %47 = arith.mulf %46, %45 : vector<4x1024xf32>
    %48 = arith.maximumf %45, %47 : vector<4x1024xf32>
    %49 = arith.truncf %48 : vector<4x1024xf32> to vector<4x1024xbf16>
    %c0_38 = arith.constant 0 : index
    %c0_39 = arith.constant 0 : index
    %50 = vector.load %arg14[%c0_38, %c0_39] : memref<1024x256xbf16, #tpu.memory_space<vmem>>, vector<1024x256xbf16>
    %cst_40 = arith.constant dense<0.000000e+00> : vector<4x256xf32>
    %51 = tpu.matmul %49, %50, %cst_40 {dimension_numbers = #tpu.dot_dimension_numbers<[1], [0], [0], [1], [0, 0, 1, 1], [], []>} : vector<4x1024xbf16>, vector<1024x256xbf16>, vector<4x256xf32> -> vector<4x256xf32>
    %c0_41 = arith.constant 0 : index
    %c0_42 = arith.constant 0 : index
    %52 = vector.load %arg15[%c0_41, %c0_42] : memref<1x256xf32, #tpu.memory_space<vmem>>, vector<1x256xf32>
    %53 = vector.broadcast %52 : vector<1x256xf32> to vector<4x256xf32>
    %54 = arith.addf %51, %53 : vector<4x256xf32>
    %c0_43 = arith.constant 0 : index
    %c0_44 = arith.constant 0 : index
    %55 = vector.load %arg24[%c0_43, %c0_44] : memref<4x256xf32, #tpu.memory_space<vmem>>, vector<4x256xf32>
    tpu.vector_store %arg24[%c0_43, %c0_44], %54 {strides = array<i32>} : memref<4x256xf32, #tpu.memory_space<vmem>>, vector<4x256xf32>,
    %cst_45 = arith.constant dense<0.000000e+00> : vector<32xf32>
    %56 = vector.multi_reduction <add>, %25, %cst_45 [0] : vector<4x32xf32> to vector<32xf32>
    %57 = vector.shape_cast %56 : vector<32xf32> to vector<1x32xf32>
    %cst_46 = arith.constant 4.000000e+00 : f32
    %58 = vector.broadcast %cst_46 : f32 to vector<1x32xf32>
    %59 = arith.divf %57, %58 : vector<1x32xf32>
    %60 = vector.broadcast %59 : vector<1x32xf32> to vector<4x32xf32>
    %61 = arith.subf %25, %60 : vector<4x32xf32>
    %62 = arith.mulf %61, %61 : vector<4x32xf32>
    %cst_47 = arith.constant dense<0.000000e+00> : vector<32xf32>
    %63 = vector.multi_reduction <add>, %62, %cst_47 [0] : vector<4x32xf32> to vector<32xf32>
    %64 = vector.shape_cast %63 : vector<32xf32> to vector<1x32xf32>
    %cst_48 = arith.constant 3.000000e+00 : f32
    %65 = vector.broadcast %cst_48 : f32 to vector<1x32xf32>
    %66 = arith.divf %64, %65 : vector<1x32xf32>
    %67 = math.sqrt %66 : vector<1x32xf32>
    %c0_49 = arith.constant 0 : index
    %c0_50 = arith.constant 0 : index
    %68 = vector.load %arg1[%c0_49, %c0_50] : memref<4x32xf32, #tpu.memory_space<vmem>>, vector<4x32xf32>
    %cst_51 = arith.constant dense<0.000000e+00> : vector<32xf32>
    %69 = vector.multi_reduction <add>, %68, %cst_51 [0] : vector<4x32xf32> to vector<32xf32>
    %70 = vector.shape_cast %69 : vector<32xf32> to vector<1x32xf32>
    %cst_52 = arith.constant 4.000000e+00 : f32
    %71 = vector.broadcast %cst_52 : f32 to vector<1x32xf32>
    %72 = arith.divf %70, %71 : vector<1x32xf32>
    %73 = vector.broadcast %72 : vector<1x32xf32> to vector<4x32xf32>
    %74 = arith.subf %68, %73 : vector<4x32xf32>
    %75 = arith.mulf %74, %74 : vector<4x32xf32>
    %cst_53 = arith.constant dense<0.000000e+00> : vector<32xf32>
    %76 = vector.multi_reduction <add>, %75, %cst_53 [0] : vector<4x32xf32> to vector<32xf32>
    %77 = vector.shape_cast %76 : vector<32xf32> to vector<1x32xf32>
    %cst_54 = arith.constant 3.000000e+00 : f32
    %78 = vector.broadcast %cst_54 : f32 to vector<1x32xf32>
    %79 = arith.divf %77, %78 : vector<1x32xf32>
    %80 = math.sqrt %79 : vector<1x32xf32>
    %81 = tpu.concatenate %59, %72 in 0 : vector<1x32xf32>, vector<1x32xf32> -> vector<2x32xf32>
    %82 = tpu.concatenate %67, %80 in 0 : vector<1x32xf32>, vector<1x32xf32> -> vector<2x32xf32>
    %c0_55 = arith.constant 0 : index
    %c0_56 = arith.constant 0 : index
    %83 = vector.load %arg16[%c0_55, %c0_56] : memref<32x64xf32, #tpu.memory_space<vmem>>, vector<32x64xf32>
    %cst_57 = arith.constant dense<0.000000e+00> : vector<2x64xf32>
    %84 = tpu.matmul %81, %83, %cst_57 {dimension_numbers = #tpu.dot_dimension_numbers<[1], [0], [0], [1], [0, 0, 1, 1], [], []>} : vector<2x32xf32>, vector<32x64xf32>, vector<2x64xf32> -> vector<2x64xf32>
    %c0_58 = arith.constant 0 : index
    %c0_59 = arith.constant 0 : index
    %85 = vector.load %arg17[%c0_58, %c0_59] : memref<32x64xf32, #tpu.memory_space<vmem>>, vector<32x64xf32>
    %cst_60 = arith.constant dense<0.000000e+00> : vector<2x64xf32>
    %86 = tpu.matmul %82, %85, %cst_60 {dimension_numbers = #tpu.dot_dimension_numbers<[1], [0], [0], [1], [0, 0, 1, 1], [], []>} : vector<2x32xf32>, vector<32x64xf32>, vector<2x64xf32> -> vector<2x64xf32>
    %87 = arith.addf %84, %86 : vector<2x64xf32>
    %c0_61 = arith.constant 0 : index
    %c0_62 = arith.constant 0 : index
    %88 = vector.load %arg18[%c0_61, %c0_62] : memref<1x64xf32, #tpu.memory_space<vmem>>, vector<1x64xf32>
    %89 = vector.broadcast %88 : vector<1x64xf32> to vector<2x64xf32>
    %90 = arith.addf %87, %89 : vector<2x64xf32>
    %cst_63 = arith.constant 2.000000e-01 : f32
    %91 = vector.broadcast %cst_63 : f32 to vector<2x64xf32>
    %92 = arith.mulf %91, %90 : vector<2x64xf32>
    %93 = arith.maximumf %90, %92 : vector<2x64xf32>
    %c0_64 = arith.constant 0 : index
    %c0_65 = arith.constant 0 : index
    %94 = vector.load %arg19[%c0_64, %c0_65] : memref<64x16xf32, #tpu.memory_space<vmem>>, vector<64x16xf32>
    %cst_66 = arith.constant dense<0.000000e+00> : vector<2x16xf32>
    %95 = tpu.matmul %93, %94, %cst_66 {dimension_numbers = #tpu.dot_dimension_numbers<[1], [0], [0], [1], [0, 0, 1, 1], [], []>} : vector<2x64xf32>, vector<64x16xf32>, vector<2x16xf32> -> vector<2x16xf32>
    %c0_67 = arith.constant 0 : index
    %c0_68 = arith.constant 0 : index
    %96 = vector.load %arg20[%c0_67, %c0_68] : memref<1x16xf32, #tpu.memory_space<vmem>>, vector<1x16xf32>
    %97 = vector.broadcast %96 : vector<1x16xf32> to vector<2x16xf32>
    %98 = arith.addf %95, %97 : vector<2x16xf32>
    %cst_69 = arith.constant 2.000000e-01 : f32
    %99 = vector.broadcast %cst_69 : f32 to vector<2x16xf32>
    %100 = arith.mulf %99, %98 : vector<2x16xf32>
    %101 = arith.maximumf %98, %100 : vector<2x16xf32>
    %c0_70 = arith.constant 0 : index
    %c0_71 = arith.constant 0 : index
    %102 = vector.load %arg21[%c0_70, %c0_71] : memref<16x1xf32, #tpu.memory_space<vmem>>, vector<16x1xf32>
    %cst_72 = arith.constant dense<0.000000e+00> : vector<2x1xf32>
    %103 = tpu.matmul %101, %102, %cst_72 {dimension_numbers = #tpu.dot_dimension_numbers<[1], [0], [0], [1], [0, 0, 1, 1], [], []>} : vector<2x16xf32>, vector<16x1xf32>, vector<2x1xf32> -> vector<2x1xf32>
    %c0_73 = arith.constant 0 : index
    %c0_74 = arith.constant 0 : index
    %104 = vector.load %arg22[%c0_73, %c0_74] : memref<1x1xf32, #tpu.memory_space<vmem>>, vector<1x1xf32>
    %105 = vector.broadcast %104 : vector<1x1xf32> to vector<2x1xf32>
    %106 = arith.addf %103, %105 : vector<2x1xf32>
    %cst_75 = arith.constant 0.000000e+00 : f32
    %107 = vector.broadcast %cst_75 : f32 to vector<2x1xf32>
    %108 = arith.subf %107, %106 : vector<2x1xf32>
    %109 = math.exp %108 : vector<2x1xf32>
    %cst_76 = arith.constant 1.000000e+00 : f32
    %110 = vector.broadcast %cst_76 : f32 to vector<2x1xf32>
    %111 = arith.addf %110, %109 : vector<2x1xf32>
    %112 = tpu.reciprocal %111 : vector<2x1xf32> -> vector<2x1xf32>
    %113 = vector.extract_strided_slice %112 {offsets = [0, 0], sizes = [1, 1], strides = [1, 1]} : vector<2x1xf32> to vector<1x1xf32>
    %c0_77 = arith.constant 0 : index
    %c0_78 = arith.constant 0 : index
    %114 = vector.load %arg26[%c0_77, %c0_78] : memref<1x1xf32, #tpu.memory_space<vmem>>, vector<1x1xf32>
    tpu.vector_store %arg26[%c0_77, %c0_78], %113 {strides = array<i32>} : memref<1x1xf32, #tpu.memory_space<vmem>>, vector<1x1xf32>,
    %115 = vector.extract_strided_slice %112 {offsets = [1, 0], sizes = [1, 1], strides = [1, 1]} : vector<2x1xf32> to vector<1x1xf32>
    %c0_79 = arith.constant 0 : index
    %c0_80 = arith.constant 0 : index
    %116 = vector.load %arg27[%c0_79, %c0_80] : memref<1x1xf32, #tpu.memory_space<vmem>>, vector<1x1xf32>
    tpu.vector_store %arg27[%c0_79, %c0_80], %115 {strides = array<i32>} : memref<1x1xf32, #tpu.memory_space<vmem>>, vector<1x1xf32>,
    return
  }
}

</mosaic_0001>

<llo_original>
// kernel: aae_forward.1
$region0: #{aae_forward.1}
  #allocation0 [shape = 'u32[]', space=smem, size = 0x4, offset = 0x4, fixed_abs, tag = 'smem constant byte address 0x4 - core index']
  #allocation1 [shape = 'u32[144,128]{1,0:T(1,128)}', space=vmem, size = 0x12000, scoped, tag = 'internal scratch']
  #allocation2 [shape = 'f32[1,1]{1,0:T(1,128)S(1)}', space=vmem, size = 0x200, scoped, tag = 'scoped memory for aae_forward.1']
  %s0 = inlined_call_operand.vmem [shape: bf16[4,256], index: 0, kind: input, shape index: {}]
  %s1 = inlined_call_operand.vmem [shape: f32[4,32], index: 1, kind: input, shape index: {}]
  %s2 = inlined_call_operand.vmem [shape: bf16[256,256], index: 2, kind: input, shape index: {}]
  %s3 = inlined_call_operand.vmem [shape: f32[1,256], index: 3, kind: input, shape index: {}]
  %s4 = inlined_call_operand.vmem [shape: bf16[256,64], index: 4, kind: input, shape index: {}]
  %s5 = inlined_call_operand.vmem [shape: f32[1,64], index: 5, kind: input, shape index: {}]
  %s6 = inlined_call_operand.vmem [shape: bf16[64,32], index: 6, kind: input, shape index: {}]
  %s7 = inlined_call_operand.vmem [shape: f32[1,32], index: 7, kind: input, shape index: {}]
  %s8 = inlined_call_operand.vmem [shape: bf16[32,16], index: 8, kind: input, shape index: {}]
  %s9 = inlined_call_operand.vmem [shape: f32[1,16], index: 9, kind: input, shape index: {}]
  %s10 = inlined_call_operand.vmem [shape: bf16[32,2], index: 10, kind: input, shape index: {}]
  %s11 = inlined_call_operand.vmem [shape: f32[1,2], index: 11, kind: input, shape index: {}]
  %s12 = inlined_call_operand.vmem [shape: bf16[16,1024], index: 12, kind: input, shape index: {}]
  %s13 = inlined_call_operand.vmem [shape: f32[1,1024], index: 13, kind: input, shape index: {}]
  %s14 = inlined_call_operand.vmem [shape: bf16[1024,256], index: 14, kind: input, shape index: {}]
  %s15 = inlined_call_operand.vmem [shape: f32[1,256], index: 15, kind: input, shape index: {}]
  %s16 = inlined_call_operand.vmem [shape: f32[32,64], index: 16, kind: input, shape index: {}]
  %s17 = inlined_call_operand.vmem [shape: f32[32,64], index: 17, kind: input, shape index: {}]
  %s18 = inlined_call_operand.vmem [shape: f32[1,64], index: 18, kind: input, shape index: {}]
  %s19 = inlined_call_operand.vmem [shape: f32[64,16], index: 19, kind: input, shape index: {}]
  %s20 = inlined_call_operand.vmem [shape: f32[1,16], index: 20, kind: input, shape index: {}]
  %s21 = inlined_call_operand.vmem [shape: f32[16,1], index: 21, kind: input, shape index: {}]
  %s22 = inlined_call_operand.<no memory space> [shape: f32[1,1], index: 22, kind: input, shape index: {}]
  %s23 = inlined_call_operand.vmem [shape: f32[4,2], index: 23, kind: output, shape index: {0}]
  %s24 = inlined_call_operand.vmem [shape: f32[4,256], index: 24, kind: output, shape index: {1}]
  %s25 = inlined_call_operand.hbm [shape: f32[4,32], index: 25, kind: output, shape index: {2}]
  %s26 = inlined_call_operand.hbm [shape: f32[1,1], index: 26, kind: output, shape index: {3}]
  %s27 = inlined_call_operand.hbm [shape: f32[1,1], index: 27, kind: output, shape index: {4}]
  %28 = xla_tuple %s23, %s24, %s25, %s26, %s27
  %s29 = sld [smem:[#allocation0]]
  $region134: #{aae_forward.1} parent=0
    _
  %s31 = ssub.s32 1, %s29
  %s32 = scalar_select 0, %s31, %s29
  %v33 = vstv %s22
  %34 = vst [vmem:[#allocation2] sm:$0x1] %v33
  $region1: #{aae_forward.1} parent=0
    #allocation3 [shape = 'u8[2048]{0}', space=vmem, size = 0x800, scoped, tag = 'output window, operand 2, single buffered']
    #allocation4 [shape = 's32[1]{0}', space=sflag, size = 0x4, scoped, tag = 'scoped memory for aae_forward.1']
    #allocation5 [shape = 'u8[512]{0}', space=vmem, size = 0x400, scoped, tag = 'output window, operand 3, single buffered']
    #allocation6 [shape = 's32[1]{0}', space=sflag, size = 0x4, scoped, tag = 'scoped memory for aae_forward.1']
    #allocation7 [shape = 'u8[512]{0}', space=vmem, size = 0x400, scoped, tag = 'output window, operand 4, single buffered']
    %35 = vsyncpa [#allocation4], 0
    %36 = vsyncpa [#allocation6], 0
    // Predicated region
    $region2: #{aae_forward.1} parent=1 // pred_check
      _
    $region3: #{aae_forward.1} parent=1 // pred_check_branch
      %38 = sbr.rel (0) target = $region5
    $region4: #{aae_forward.1} parent=1 // pred_region
      _
    $region5: #{aae_forward.1} parent=1 // pred_fallthru
      _
    // Predicated region
    $region6: #{aae_forward.1} parent=1 // pred_check
      _
    $region7: #{aae_forward.1} parent=1 // pred_check_branch
      %40 = sbr.rel (0) target = $region9
    $region8: #{aae_forward.1} parent=1 // pred_region
      _
    $region9: #{aae_forward.1} parent=1 // pred_fallthru
      _
    // Predicated region
    $region10: #{aae_forward.1} parent=1 // pred_check
      _
    $region11: #{aae_forward.1} parent=1 // pred_check_branch
      %42 = sbr.rel (0) target = $region13
    $region12: #{aae_forward.1} parent=1 // pred_region
      _
    $region13: #{aae_forward.1} parent=1 // pred_fallthru
      _
    // Predicated region
    $region14: #{aae_forward.1} parent=1 // pred_check
      _
    $region15: #{aae_forward.1} parent=1 // pred_check_branch
      %44 = sbr.rel (0) target = $region17
    $region16: #{aae_forward.1} parent=1 // pred_region
      _
    $region17: #{aae_forward.1} parent=1 // pred_fallthru
      _
    // Predicated region
    $region18: #{aae_forward.1} parent=1 // pred_check
      _
    $region19: #{aae_forward.1} parent=1 // pred_check_branch
      %46 = sbr.rel (0) target = $region21
    $region20: #{aae_forward.1} parent=1 // pred_region
      _
    $region21: #{aae_forward.1} parent=1 // pred_fallthru
      _
    // Predicated region
    $region22: #{aae_forward.1} parent=1 // pred_check
      _
    $region23: #{aae_forward.1} parent=1 // pred_check_branch
      %48 = sbr.rel (0) target = $region25
    $region24: #{aae_forward.1} parent=1 // pred_region
      _
    $region25: #{aae_forward.1} parent=1 // pred_fallthru
      _
    // Predicated region
    $region26: #{aae_forward.1} parent=1 // pred_check
      _
    $region27: #{aae_forward.1} parent=1 // pred_check_branch
      %50 = sbr.rel (0) target = $region29
    $region28: #{aae_forward.1} parent=1 // pred_region
      _
    $region29: #{aae_forward.1} parent=1 // pred_fallthru
      _
    // Predicated region
    $region30: #{aae_forward.1} parent=1 // pred_check
      _
    $region31: #{aae_forward.1} parent=1 // pred_check_branch
      %52 = sbr.rel (0) target = $region33
    $region32: #{aae_forward.1} parent=1 // pred_region
      _
    $region33: #{aae_forward.1} parent=1 // pred_fallthru
      _
    // Predicated region
    $region34: #{aae_forward.1} parent=1 // pred_check
      _
    $region35: #{aae_forward.1} parent=1 // pred_check_branch
      %54 = sbr.rel (0) target = $region37
    $region36: #{aae_forward.1} parent=1 // pred_region
      _
    $region37: #{aae_forward.1} parent=1 // pred_fallthru
      _
    // Predicated region
    $region38: #{aae_forward.1} parent=1 // pred_check
      _
    $region39: #{aae_forward.1} parent=1 // pred_check_branch
      %56 = sbr.rel (0) target = $region41
    $region40: #{aae_forward.1} parent=1 // pred_region
      _
    $region41: #{aae_forward.1} parent=1 // pred_fallthru
      _
    // Predicated region
    $region42: #{aae_forward.1} parent=1 // pred_check
      _
    $region43: #{aae_forward.1} parent=1 // pred_check_branch
      %58 = sbr.rel (0) target = $region45
    $region44: #{aae_forward.1} parent=1 // pred_region
      _
    $region45: #{aae_forward.1} parent=1 // pred_fallthru
      _
    // Predicated region
    $region46: #{aae_forward.1} parent=1 // pred_check
      _
    $region47: #{aae_forward.1} parent=1 // pred_check_branch
      %60 = sbr.rel (0) target = $region49
    $region48: #{aae_forward.1} parent=1 // pred_region
      _
    $region49: #{aae_forward.1} parent=1 // pred_fallthru
      _
    // Predicated region
    $region50: #{aae_forward.1} parent=1 // pred_check
      _
    $region51: #{aae_forward.1} parent=1 // pred_check_branch
      %62 = sbr.rel (0) target = $region53
    $region52: #{aae_forward.1} parent=1 // pred_region
      _
    $region53: #{aae_forward.1} parent=1 // pred_fallthru
      _
    // Predicated region
    $region54: #{aae_forward.1} parent=1 // pred_check
      _
    $region55: #{aae_forward.1} parent=1 // pred_check_branch
      %64 = sbr.rel (0) target = $region57
    $region56: #{aae_forward.1} parent=1 // pred_region
      _
    $region57: #{aae_forward.1} parent=1 // pred_fallthru
      _
    // Predicated region
    $region58: #{aae_forward.1} parent=1 // pred_check
      _
    $region59: #{aae_forward.1} parent=1 // pred_check_branch
      %66 = sbr.rel (0) target = $region61
    $region60: #{aae_forward.1} parent=1 // pred_region
      _
    $region61: #{aae_forward.1} parent=1 // pred_fallthru
      _
    // Predicated region
    $region62: #{aae_forward.1} parent=1 // pred_check
      _
    $region63: #{aae_forward.1} parent=1 // pred_check_branch
      %68 = sbr.rel (0) target = $region65
    $region64: #{aae_forward.1} parent=1 // pred_region
      _
    $region65: #{aae_forward.1} parent=1 // pred_fallthru
      _
    // Predicated region
    $region66: #{aae_forward.1} parent=1 // pred_check
      _
    $region67: #{aae_forward.1} parent=1 // pred_check_branch
      %70 = sbr.rel (0) target = $region69
    $region68: #{aae_forward.1} parent=1 // pred_region
      _
    $region69: #{aae_forward.1} parent=1 // pred_fallthru
      _
    // Predicated region
    $region70: #{aae_forward.1} parent=1 // pred_check
      _
    $region71: #{aae_forward.1} parent=1 // pred_check_branch
      %72 = sbr.rel (0) target = $region73
    $region72: #{aae_forward.1} parent=1 // pred_region
      _
    $region73: #{aae_forward.1} parent=1 // pred_fallthru
      _
    // Predicated region
    $region74: #{aae_forward.1} parent=1 // pred_check
      _
    $region75: #{aae_forward.1} parent=1 // pred_check_branch
      %74 = sbr.rel (0) target = $region77
    $region76: #{aae_forward.1} parent=1 // pred_region
      _
    $region77: #{aae_forward.1} parent=1 // pred_fallthru
      _
    // Predicated region
    $region78: #{aae_forward.1} parent=1 // pred_check
      _
    $region79: #{aae_forward.1} parent=1 // pred_check_branch
      %76 = sbr.rel (0) target = $region81
    $region80: #{aae_forward.1} parent=1 // pred_region
      _
    $region81: #{aae_forward.1} parent=1 // pred_fallthru
      _
    // Predicated region
    $region82: #{aae_forward.1} parent=1 // pred_check
      _
    $region83: #{aae_forward.1} parent=1 // pred_check_branch
      %78 = sbr.rel (0) target = $region85
    $region84: #{aae_forward.1} parent=1 // pred_region
      _
    $region85: #{aae_forward.1} parent=1 // pred_fallthru
      _
    // Predicated region
    $region86: #{aae_forward.1} parent=1 // pred_check
      _
    $region87: #{aae_forward.1} parent=1 // pred_check_branch
      %80 = sbr.rel (0) target = $region89
    $region88: #{aae_forward.1} parent=1 // pred_region
      _
    $region89: #{aae_forward.1} parent=1 // pred_fallthru
      _
    // Predicated region
    $region90: #{aae_forward.1} parent=1 // pred_check
      _
    $region91: #{aae_forward.1} parent=1 // pred_check_branch
      %82 = sbr.rel (0) target = $region93
    $region92: #{aae_forward.1} parent=1 // pred_region
      _
    $region93: #{aae_forward.1} parent=1 // pred_fallthru
      _
    %v84 = vld [vmem:[%s0] sm:$0xf]
    %v85 = vld [vmem:[%s2] sm:$0xff]
    %v86 = vld [vmem:[%s2 + $0x8] sm:$0xff]
    %v87 = vld [vmem:[%s2 + $0x10] sm:$0xff]
    %v88 = vld [vmem:[%s2 + $0x18] sm:$0xff]
    %v89 = vld [vmem:[%s2 + $0x20] sm:$0xff]
    %v90 = vld [vmem:[%s2 + $0x28] sm:$0xff]
    %v91 = vld [vmem:[%s2 + $0x30] sm:$0xff]
    %v92 = vld [vmem:[%s2 + $0x38] sm:$0xff]
    %v93 = vld [vmem:[%s2 + $0x40] sm:$0xff]
    %v94 = vld [vmem:[%s2 + $0x48] sm:$0xff]
    %v95 = vld [vmem:[%s2 + $0x50] sm:$0xff]
    %v96 = vld [vmem:[%s2 + $0x58] sm:$0xff]
    %v97 = vld [vmem:[%s2 + $0x60] sm:$0xff]
    %v98 = vld [vmem:[%s2 + $0x68] sm:$0xff]
    %v99 = vld [vmem:[%s2 + $0x70] sm:$0xff]
    %v100 = vld [vmem:[%s2 + $0x78] sm:$0xff]
    %v101 = vld [vmem:[%s2 + $0x80] sm:$0xff]
    %v102 = vld [vmem:[%s2 + $0x88] sm:$0xff]
    %v103 = vld [vmem:[%s2 + $0x90] sm:$0xff]
    %v104 = vld [vmem:[%s2 + $0x98] sm:$0xff]
    %v105 = vld [vmem:[%s2 + $0xa0] sm:$0xff]
    %v106 = vld [vmem:[%s2 + $0xa8] sm:$0xff]
    %v107 = vld [vmem:[%s2 + $0xb0] sm:$0xff]
    %v108 = vld [vmem:[%s2 + $0xb8] sm:$0xff]
    %v109 = vld [vmem:[%s2 + $0xc0] sm:$0xff]
    %v110 = vld [vmem:[%s2 + $0xc8] sm:$0xff]
    %v111 = vld [vmem:[%s2 + $0xd0] sm:$0xff]
    %v112 = vld [vmem:[%s2 + $0xd8] sm:$0xff]
    %v113 = vld [vmem:[%s2 + $0xe0] sm:$0xff]
    %v114 = vld [vmem:[%s2 + $0xe8] sm:$0xff]
    %v115 = vld [vmem:[%s2 + $0xf0] sm:$0xff]
    %v116 = vld [vmem:[%s2 + $0xf8] sm:$0xff]
    %v117 = vld [vmem:[%s3] sm:$0x3]
    %v119 = vlaneseq
    %v120 = vshrl.u32 %v119, 7
    %v121 = vsub.s32 0, %v120
    %v122 = vrot.slane %v117, %v121
    %v123 = vlaneseq
    %v124 = vshrl.u32 %v123, 7
    %v125 = vsub.s32 1, %v124
    %v126 = vrot.slane %v117, %v125
    %v131 = vunpack.c.l.s4 1983009808
    %v132 = vunpack.c.0.s8 %v131
    %v133 = vlaneseq
    %v134 = vshrl.u32 %v133, 7
    %v135 = vsub.s32 %v132, %v134
    %v136 = vrot.slane %v84, %v135
    %v137 = vcombine.high %v136, %v136
    %v172 = vunpack.c.l.b16 %v85
    %v173 = vunpack.c.h.b16 %v85
    %v174 = vunpack.c.l.b16 %v86
    %v175 = vunpack.c.h.b16 %v86
    %v176 = vunpack.c.l.b16 %v87
    %v177 = vunpack.c.h.b16 %v87
    %v178 = vunpack.c.l.b16 %v88
    %v179 = vunpack.c.h.b16 %v88
    %v180 = vunpack.c.l.b16 %v89
    %v181 = vunpack.c.h.b16 %v89
    %v182 = vunpack.c.l.b16 %v90
    %v183 = vunpack.c.h.b16 %v90
    %v184 = vunpack.c.l.b16 %v91
    %v185 = vunpack.c.h.b16 %v91
    %v186 = vunpack.c.l.b16 %v92
    %v187 = vunpack.c.h.b16 %v92
    %v188 = vunpack.c.l.b16 %v93
    %v189 = vunpack.c.h.b16 %v93
    %v190 = vunpack.c.l.b16 %v94
    %v191 = vunpack.c.h.b16 %v94
    %v192 = vunpack.c.l.b16 %v95
    %v193 = vunpack.c.h.b16 %v95
    %v194 = vunpack.c.l.b16 %v96
    %v195 = vunpack.c.h.b16 %v96
    %v196 = vunpack.c.l.b16 %v97
    %v197 = vunpack.c.h.b16 %v97
    %v198 = vunpack.c.l.b16 %v98
    %v199 = vunpack.c.h.b16 %v98
    %v200 = vunpack.c.l.b16 %v99
    %v201 = vunpack.c.h.b16 %v99
    %v202 = vunpack.c.l.b16 %v100
    %v203 = vunpack.c.h.b16 %v100
    %v204 = vunpack.c.l.b16 %v101
    %v205 = vunpack.c.h.b16 %v101
    %v206 = vunpack.c.l.b16 %v102
    %v207 = vunpack.c.h.b16 %v102
    %v208 = vunpack.c.l.b16 %v103
    %v209 = vunpack.c.h.b16 %v103
    %v210 = vunpack.c.l.b16 %v104
    %v211 = vunpack.c.h.b16 %v104
    %v212 = vunpack.c.l.b16 %v105
    %v213 = vunpack.c.h.b16 %v105
    %v214 = vunpack.c.l.b16 %v106
    %v215 = vunpack.c.h.b16 %v106
    %v216 = vunpack.c.l.b16 %v107
    %v217 = vunpack.c.h.b16 %v107
    %v218 = vunpack.c.l.b16 %v108
    %v219 = vunpack.c.h.b16 %v108
    %v220 = vunpack.c.l.b16 %v109
    %v221 = vunpack.c.h.b16 %v109
    %v222 = vunpack.c.l.b16 %v110
    %v223 = vunpack.c.h.b16 %v110
    %v224 = vunpack.c.l.b16 %v111
    %v225 = vunpack.c.h.b16 %v111
    %v226 = vunpack.c.l.b16 %v112
    %v227 = vunpack.c.h.b16 %v112
    %v228 = vunpack.c.l.b16 %v113
    %v229 = vunpack.c.h.b16 %v113
    %v230 = vunpack.c.l.b16 %v114
    %v231 = vunpack.c.h.b16 %v114
    %v232 = vunpack.c.l.b16 %v115
    %v233 = vunpack.c.h.b16 %v115
    %v234 = vunpack.c.l.b16 %v116
    %v235 = vunpack.c.h.b16 %v116
    %v236 = vpack.c.b16 %v174, %v172
    %v237 = vpack.c.b16 %v175, %v173
    %v238 = vpack.c.b16 %v178, %v176
    %v239 = vpack.c.b16 %v179, %v177
    %v240 = vpack.c.b16 %v182, %v180
    %v241 = vpack.c.b16 %v183, %v181
    %v242 = vpack.c.b16 %v186, %v184
    %v243 = vpack.c.b16 %v187, %v185
    %v244 = vpack.c.b16 %v190, %v188
    %v245 = vpack.c.b16 %v191, %v189
    %v246 = vpack.c.b16 %v194, %v192
    %v247 = vpack.c.b16 %v195, %v193
    %v248 = vpack.c.b16 %v198, %v196
    %v249 = vpack.c.b16 %v199, %v197
    %v250 = vpack.c.b16 %v202, %v200
    %v251 = vpack.c.b16 %v203, %v201
    %v252 = vpack.c.b16 %v206, %v204
    %v253 = vpack.c.b16 %v207, %v205
    %v254 = vpack.c.b16 %v210, %v208
    %v255 = vpack.c.b16 %v211, %v209
    %v256 = vpack.c.b16 %v214, %v212
    %v257 = vpack.c.b16 %v215, %v213
    %v258 = vpack.c.b16 %v218, %v216
    %v259 = vpack.c.b16 %v219, %v217
    %v260 = vpack.c.b16 %v222, %v220
    %v261 = vpack.c.b16 %v223, %v221
    %v262 = vpack.c.b16 %v226, %v224
    %v263 = vpack.c.b16 %v227, %v225
    %v264 = vpack.c.b16 %v230, %v228
    %v265 = vpack.c.b16 %v231, %v229
    %v266 = vpack.c.b16 %v234, %v232
    %v267 = vpack.c.b16 %v235, %v233
    %300 = vmatprep.subr.bf16.mxu0 %v237
    %301 = vmatpush1.bf16.msra.mxu0 %v236
    %302 = vmatprep.subr.bf16.mxu0 %v239
    %303 = vmatpush1.bf16.msra.mxu0 %v238
    %304 = vmatprep.subr.bf16.mxu0 %v241
    %305 = vmatpush1.bf16.msra.mxu0 %v240
    %306 = vmatprep.subr.bf16.mxu0 %v243
    %307 = vmatpush1.bf16.msra.mxu0 %v242
    %308 = vmatprep.subr.bf16.mxu0 %v245
    %309 = vmatpush1.bf16.msra.mxu0 %v244
    %310 = vmatprep.subr.bf16.mxu0 %v247
    %311 = vmatpush1.bf16.msra.mxu0 %v246
    %312 = vmatprep.subr.bf16.mxu0 %v249
    %313 = vmatpush1.bf16.msra.mxu0 %v248
    %314 = vmatprep.subr.bf16.mxu0 %v251
    %315 = vmatpush1.bf16.msra.mxu0 %v250
    %316 = vmatprep.subr.bf16.mxu0 %v253
    %317 = vmatpush1.bf16.msra.mxu0 %v252
    %318 = vmatprep.subr.bf16.mxu0 %v255
    %319 = vmatpush1.bf16.msra.mxu0 %v254
    %320 = vmatprep.subr.bf16.mxu0 %v257
    %321 = vmatpush1.bf16.msra.mxu0 %v256
    %322 = vmatprep.subr.bf16.mxu0 %v259
    %323 = vmatpush1.bf16.msra.mxu0 %v258
    %324 = vmatprep.subr.bf16.mxu0 %v261
    %325 = vmatpush1.bf16.msra.mxu0 %v260
    %326 = vmatprep.subr.bf16.mxu0 %v263
    %327 = vmatpush1.bf16.msra.mxu0 %v262
    %328 = vmatprep.subr.bf16.mxu0 %v265
    %329 = vmatpush1.bf16.msra.mxu0 %v264
    %330 = vmatprep.subr.bf16.mxu0 %v267
    %331 = vmatpush1.bf16.msra.mxu0 %v266
    %332 = vmatprep.mubr.bf16.mxu0 %v137
    %333 = vmatmul.mubr.bf16.gmra.mrb[0].mxu0 %v136
    %v334 = vpop.f32.mrb[0].mxu0
    %v335 = vadd.f32 %v122, %v334
    %v336 = vpop.f32.mrb[0].mxu0
    %v337 = vadd.f32 %v126, %v336
    %v338 = vpop.f32.mrb[0].mxu0
    %v339 = vpop.f32.mrb[0].mxu0
    %340 = vdwg.mxu0
    %v341 = vmul.f32 %v335, 0.2
    %v342 = vmul.f32 %v337, 0.2
    %v343 = vmax.f32 %v335, %v341
    %v344 = vmax.f32 %v337, %v342
    %v345 = vpack.c.bf16 %v343, %v343
    %v346 = vpack.c.bf16 %v344, %v344
    %v347 = vld [vmem:[%s4] sm:$0xf]
    %v348 = vld [vmem:[%s4 + $0x4] sm:$0xf]
    %v349 = vld [vmem:[%s4 + $0x8] sm:$0xf]
    %v350 = vld [vmem:[%s4 + $0xc] sm:$0xf]
    %v351 = vld [vmem:[%s4 + $0x10] sm:$0xf]
    %v352 = vld [vmem:[%s4 + $0x14] sm:$0xf]
    %v353 = vld [vmem:[%s4 + $0x18] sm:$0xf]
    %v354 = vld [vmem:[%s4 + $0x1c] sm:$0xf]
    %v355 = vld [vmem:[%s4 + $0x20] sm:$0xf]
    %v356 = vld [vmem:[%s4 + $0x24] sm:$0xf]
    %v357 = vld [vmem:[%s4 + $0x28] sm:$0xf]
    %v358 = vld [vmem:[%s4 + $0x2c] sm:$0xf]
    %v359 = vld [vmem:[%s4 + $0x30] sm:$0xf]
    %v360 = vld [vmem:[%s4 + $0x34] sm:$0xf]
    %v361 = vld [vmem:[%s4 + $0x38] sm:$0xf]
    %v362 = vld [vmem:[%s4 + $0x3c] sm:$0xf]
    %v363 = vld [vmem:[%s4 + $0x40] sm:$0xf]
    %v364 = vld [vmem:[%s4 + $0x44] sm:$0xf]
    %v365 = vld [vmem:[%s4 + $0x48] sm:$0xf]
    %v366 = vld [vmem:[%s4 + $0x4c] sm:$0xf]
    %v367 = vld [vmem:[%s4 + $0x50] sm:$0xf]
    %v368 = vld [vmem:[%s4 + $0x54] sm:$0xf]
    %v369 = vld [vmem:[%s4 + $0x58] sm:$0xf]
    %v370 = vld [vmem:[%s4 + $0x5c] sm:$0xf]
    %v371 = vld [vmem:[%s4 + $0x60] sm:$0xf]
    %v372 = vld [vmem:[%s4 + $0x64] sm:$0xf]
    %v373 = vld [vmem:[%s4 + $0x68] sm:$0xf]
    %v374 = vld [vmem:[%s4 + $0x6c] sm:$0xf]
    %v375 = vld [vmem:[%s4 + $0x70] sm:$0xf]
    %v376 = vld [vmem:[%s4 + $0x74] sm:$0xf]
    %v377 = vld [vmem:[%s4 + $0x78] sm:$0xf]
    %v378 = vld [vmem:[%s4 + $0x7c] sm:$0xf]
    %v379 = vld [vmem:[%s5] sm:$0x1]
    %v381 = vlaneseq
    %v382 = vshrl.u32 %v381, 7
    %v383 = vsub.s32 0, %v382
    %v384 = vrot.slane %v379, %v383
    %v418 = vunpack.c.l.b16 %v347
    %v419 = vunpack.c.l.b16 %v348
    %v420 = vunpack.c.l.b16 %v349
    %v421 = vunpack.c.l.b16 %v350
    %v422 = vunpack.c.l.b16 %v351
    %v423 = vunpack.c.l.b16 %v352
    %v424 = vunpack.c.l.b16 %v353
    %v425 = vunpack.c.l.b16 %v354
    %v426 = vunpack.c.l.b16 %v355
    %v427 = vunpack.c.l.b16 %v356
    %v428 = vunpack.c.l.b16 %v357
    %v429 = vunpack.c.l.b16 %v358
    %v430 = vunpack.c.l.b16 %v359
    %v431 = vunpack.c.l.b16 %v360
    %v432 = vunpack.c.l.b16 %v361
    %v433 = vunpack.c.l.b16 %v362
    %v434 = vunpack.c.l.b16 %v363
    %v435 = vunpack.c.l.b16 %v364
    %v436 = vunpack.c.l.b16 %v365
    %v437 = vunpack.c.l.b16 %v366
    %v438 = vunpack.c.l.b16 %v367
    %v439 = vunpack.c.l.b16 %v368
    %v440 = vunpack.c.l.b16 %v369
    %v441 = vunpack.c.l.b16 %v370
    %v442 = vunpack.c.l.b16 %v371
    %v443 = vunpack.c.l.b16 %v372
    %v444 = vunpack.c.l.b16 %v373
    %v445 = vunpack.c.l.b16 %v374
    %v446 = vunpack.c.l.b16 %v375
    %v447 = vunpack.c.l.b16 %v376
    %v448 = vunpack.c.l.b16 %v377
    %v449 = vunpack.c.l.b16 %v378
    %v450 = vpack.c.b16 %v419, %v418
    %v451 = vpack.c.b16 %v421, %v420
    %v452 = vpack.c.b16 %v423, %v422
    %v453 = vpack.c.b16 %v425, %v424
    %v454 = vpack.c.b16 %v427, %v426
    %v455 = vpack.c.b16 %v429, %v428
    %v456 = vpack.c.b16 %v431, %v430
    %v457 = vpack.c.b16 %v433, %v432
    %v458 = vpack.c.b16 %v435, %v434
    %v459 = vpack.c.b16 %v437, %v436
    %v460 = vpack.c.b16 %v439, %v438
    %v461 = vpack.c.b16 %v441, %v440
    %v462 = vpack.c.b16 %v443, %v442
    %v463 = vpack.c.b16 %v445, %v444
    %v464 = vpack.c.b16 %v447, %v446
    %v465 = vpack.c.b16 %v449, %v448
    %482 = vmatprep.subr.bf16.mxu0 0
    %483 = vmatpush1.bf16.msra.mxu0 %v450
    %484 = vmatprep.subr.bf16.mxu0 0
    %485 = vmatpush1.bf16.msra.mxu0 %v451
    %486 = vmatprep.subr.bf16.mxu0 0
    %487 = vmatpush1.bf16.msra.mxu0 %v452
    %488 = vmatprep.subr.bf16.mxu0 0
    %489 = vmatpush1.bf16.msra.mxu0 %v453
    %490 = vmatprep.subr.bf16.mxu0 0
    %491 = vmatpush1.bf16.msra.mxu0 %v454
    %492 = vmatprep.subr.bf16.mxu0 0
    %493 = vmatpush1.bf16.msra.mxu0 %v455
    %494 = vmatprep.subr.bf16.mxu0 0
    %495 = vmatpush1.bf16.msra.mxu0 %v456
    %496 = vmatprep.subr.bf16.mxu0 0
    %497 = vmatpush1.bf16.msra.mxu0 %v457
    %498 = vmatprep.subr.bf16.mxu0 0
    %499 = vmatpush1.bf16.msra.mxu0 %v458
    %500 = vmatprep.subr.bf16.mxu0 0
    %501 = vmatpush1.bf16.msra.mxu0 %v459
    %502 = vmatprep.subr.bf16.mxu0 0
    %503 = vmatpush1.bf16.msra.mxu0 %v460
    %504 = vmatprep.subr.bf16.mxu0 0
    %505 = vmatpush1.bf16.msra.mxu0 %v461
    %506 = vmatprep.subr.bf16.mxu0 0
    %507 = vmatpush1.bf16.msra.mxu0 %v462
    %508 = vmatprep.subr.bf16.mxu0 0
    %509 = vmatpush1.bf16.msra.mxu0 %v463
    %510 = vmatprep.subr.bf16.mxu0 0
    %511 = vmatpush1.bf16.msra.mxu0 %v464
    %512 = vmatprep.subr.bf16.mxu0 0
    %513 = vmatpush1.bf16.msra.mxu0 %v465
    %514 = vmatprep.mubr.bf16.mxu0 %v346
    %515 = vmatmul.mubr.bf16.gmra.mrb[0].mxu0 %v345
    %v516 = vpop.f32.mrb[0].mxu0
    %v517 = vadd.f32 %v384, %v516
    %v518 = vpop.f32.mrb[0].mxu0
    %v519 = vpop.f32.mrb[0].mxu0
    %v520 = vpop.f32.mrb[0].mxu0
    %521 = vdwg.mxu0
    %v522 = vmul.f32 %v517, 0.2
    %v523 = vmax.f32 %v517, %v522
    %v524 = vpack.c.bf16 %v523, %v523
    %v525 = vld [vmem:[%s6] sm:$0xf]
    %v526 = vld [vmem:[%s6 + $0x4] sm:$0xf]
    %v527 = vld [vmem:[%s6 + $0x8] sm:$0xf]
    %v528 = vld [vmem:[%s6 + $0xc] sm:$0xf]
    %v529 = vld [vmem:[%s6 + $0x10] sm:$0xf]
    %v530 = vld [vmem:[%s6 + $0x14] sm:$0xf]
    %v531 = vld [vmem:[%s6 + $0x18] sm:$0xf]
    %v532 = vld [vmem:[%s6 + $0x1c] sm:$0xf]
    %v533 = vld [vmem:[%s7] sm:$0x1]
    %v535 = vlaneseq
    %v536 = vshrl.u32 %v535, 7
    %v537 = vsub.s32 0, %v536
    %v538 = vrot.slane %v533, %v537
    %v548 = vunpack.c.l.b16 %v525
    %v549 = vunpack.c.l.b16 %v526
    %v550 = vunpack.c.l.b16 %v527
    %v551 = vunpack.c.l.b16 %v528
    %v552 = vunpack.c.l.b16 %v529
    %v553 = vunpack.c.l.b16 %v530
    %v554 = vunpack.c.l.b16 %v531
    %v555 = vunpack.c.l.b16 %v532
    %v556 = vpack.c.b16 %v549, %v548
    %v557 = vpack.c.b16 %v551, %v550
    %v558 = vpack.c.b16 %v553, %v552
    %v559 = vpack.c.b16 %v555, %v554
    %vm564 = vcmask 523264
    %v566 = vsel %vm564, %v524, 0
    %568 = vmatprep.subr.bf16.mxu0 0
    %569 = vmatpush1.bf16.msra.mxu0 %v556
    %570 = vmatprep.subr.bf16.mxu0 0
    %571 = vmatpush1.bf16.msra.mxu0 %v557
    %572 = vmatprep.subr.bf16.mxu0 0
    %573 = vmatpush1.bf16.msra.mxu0 %v558
    %574 = vmatprep.subr.bf16.mxu0 0
    %575 = vmatpush1.bf16.msra.mxu0 %v559
    %576 = vmatprep.subr.bf16.mxu0 0
    %577 = vmatpush1.bf16.msra.mxu0 0
    %578 = vmatprep.subr.bf16.mxu0 0
    %579 = vmatpush1.bf16.msra.mxu0 0
    %580 = vmatprep.subr.bf16.mxu0 0
    %581 = vmatpush1.bf16.msra.mxu0 0
    %582 = vmatprep.subr.bf16.mxu0 0
    %583 = vmatpush1.bf16.msra.mxu0 0
    %584 = vmatprep.subr.bf16.mxu0 0
    %585 = vmatpush1.bf16.msra.mxu0 0
    %586 = vmatprep.subr.bf16.mxu0 0
    %587 = vmatpush1.bf16.msra.mxu0 0
    %588 = vmatprep.subr.bf16.mxu0 0
    %589 = vmatpush1.bf16.msra.mxu0 0
    %590 = vmatprep.subr.bf16.mxu0 0
    %591 = vmatpush1.bf16.msra.mxu0 0
    %592 = vmatprep.subr.bf16.mxu0 0
    %593 = vmatpush1.bf16.msra.mxu0 0
    %594 = vmatprep.subr.bf16.mxu0 0
    %595 = vmatpush1.bf16.msra.mxu0 0
    %596 = vmatprep.subr.bf16.mxu0 0
    %597 = vmatpush1.bf16.msra.mxu0 0
    %598 = vmatprep.subr.bf16.mxu0 0
    %599 = vmatpush1.bf16.msra.mxu0 0
    %600 = vmatprep.mubr.bf16.mxu0 0
    %601 = vmatmul.mubr.bf16.gmra.mrb[0].mxu0 %v566
    %v602 = vpop.f32.mrb[0].mxu0
    %v603 = vadd.f32 %v538, %v602
    %v604 = vpop.f32.mrb[0].mxu0
    %v605 = vpop.f32.mrb[0].mxu0
    %v606 = vpop.f32.mrb[0].mxu0
    %607 = vdwg.mxu0
    %v608 = vmax.f32 %v603, 0.0
    %vm609 = vcmask 257024
    %610 = vst.msk [vmem:[#allocation3] sm:$0xf] %vm609, %v608
    %v611 = vpack.c.bf16 %v608, %v608
    %v612 = vld [vmem:[%s10] sm:$0xf]
    %v613 = vld [vmem:[%s10 + $0x4] sm:$0xf]
    %v614 = vld [vmem:[%s10 + $0x8] sm:$0xf]
    %v615 = vld [vmem:[%s10 + $0xc] sm:$0xf]
    %v616 = vld [vmem:[%s11] sm:$0x1]
    %v618 = vlaneseq
    %v619 = vshrl.u32 %v618, 7
    %v620 = vsub.s32 0, %v619
    %v621 = vrot.slane %v616, %v620
    %v627 = vunpack.c.l.b16 %v612
    %v628 = vunpack.c.l.b16 %v613
    %v629 = vunpack.c.l.b16 %v614
    %v630 = vunpack.c.l.b16 %v615
    %v631 = vpack.c.b16 %v628, %v627
    %v632 = vpack.c.b16 %v630, %v629
    %vm635 = vcmask 261120
    %v637 = vsel %vm635, %v611, 0
    %639 = vmatprep.subr.bf16.mxu0 0
    %640 = vmatpush1.bf16.msra.mxu0 %v631
    %641 = vmatprep.subr.bf16.mxu0 0
    %642 = vmatpush1.bf16.msra.mxu0 %v632
    %643 = vmatprep.subr.bf16.mxu0 0
    %644 = vmatpush1.bf16.msra.mxu0 0
    %645 = vmatprep.subr.bf16.mxu0 0
    %646 = vmatpush1.bf16.msra.mxu0 0
    %647 = vmatprep.subr.bf16.mxu0 0
    %648 = vmatpush1.bf16.msra.mxu0 0
    %649 = vmatprep.subr.bf16.mxu0 0
    %650 = vmatpush1.bf16.msra.mxu0 0
    %651 = vmatprep.subr.bf16.mxu0 0
    %652 = vmatpush1.bf16.msra.mxu0 0
    %653 = vmatprep.subr.bf16.mxu0 0
    %654 = vmatpush1.bf16.msra.mxu0 0
    %655 = vmatprep.subr.bf16.mxu0 0
    %656 = vmatpush1.bf16.msra.mxu0 0
    %657 = vmatprep.subr.bf16.mxu0 0
    %658 = vmatpush1.bf16.msra.mxu0 0
    %659 = vmatprep.subr.bf16.mxu0 0
    %660 = vmatpush1.bf16.msra.mxu0 0
    %661 = vmatprep.subr.bf16.mxu0 0
    %662 = vmatpush1.bf16.msra.mxu0 0
    %663 = vmatprep.subr.bf16.mxu0 0
    %664 = vmatpush1.bf16.msra.mxu0 0
    %665 = vmatprep.subr.bf16.mxu0 0
    %666 = vmatpush1.bf16.msra.mxu0 0
    %667 = vmatprep.subr.bf16.mxu0 0
    %668 = vmatpush1.bf16.msra.mxu0 0
    %669 = vmatprep.subr.bf16.mxu0 0
    %670 = vmatpush1.bf16.msra.mxu0 0
    %671 = vmatprep.mubr.bf16.mxu0 0
    %672 = vmatmul.mubr.bf16.gmra.mrb[0].mxu0 %v637
    %v673 = vpop.f32.mrb[0].mxu0
    %v674 = vadd.f32 %v621, %v673
    %v675 = vpop.f32.mrb[0].mxu0
    %v676 = vpop.f32.mrb[0].mxu0
    %v677 = vpop.f32.mrb[0].mxu0
    %678 = vdwg.mxu0
    %vm679 = vcmask 11264
    %680 = vst.msk [vmem:[%s23] sm:$0xf] %vm679, %v674
    %v681 = vld [vmem:[%s8] sm:$0xf]
    %v682 = vld [vmem:[%s8 + $0x4] sm:$0xf]
    %v683 = vld [vmem:[%s8 + $0x8] sm:$0xf]
    %v684 = vld [vmem:[%s8 + $0xc] sm:$0xf]
    %v685 = vld [vmem:[%s9] sm:$0x1]
    %v687 = vlaneseq
    %v688 = vshrl.u32 %v687, 7
    %v689 = vsub.s32 0, %v688
    %v690 = vrot.slane %v685, %v689
    %v696 = vunpack.c.l.b16 %v681
    %v697 = vunpack.c.l.b16 %v682
    %v698 = vunpack.c.l.b16 %v683
    %v699 = vunpack.c.l.b16 %v684
    %v700 = vpack.c.b16 %v697, %v696
    %v701 = vpack.c.b16 %v699, %v698
    %704 = vmatprep.subr.bf16.mxu0 0
    %705 = vmatpush1.bf16.msra.mxu0 %v700
    %706 = vmatprep.subr.bf16.mxu0 0
    %707 = vmatpush1.bf16.msra.mxu0 %v701
    %708 = vmatprep.subr.bf16.mxu0 0
    %709 = vmatpush1.bf16.msra.mxu0 0
    %710 = vmatprep.subr.bf16.mxu0 0
    %711 = vmatpush1.bf16.msra.mxu0 0
    %712 = vmatprep.subr.bf16.mxu0 0
    %713 = vmatpush1.bf16.msra.mxu0 0
    %714 = vmatprep.subr.bf16.mxu0 0
    %715 = vmatpush1.bf16.msra.mxu0 0
    %716 = vmatprep.subr.bf16.mxu0 0
    %717 = vmatpush1.bf16.msra.mxu0 0
    %718 = vmatprep.subr.bf16.mxu0 0
    %719 = vmatpush1.bf16.msra.mxu0 0
    %720 = vmatprep.subr.bf16.mxu0 0
    %721 = vmatpush1.bf16.msra.mxu0 0
    %722 = vmatprep.subr.bf16.mxu0 0
    %723 = vmatpush1.bf16.msra.mxu0 0
    %724 = vmatprep.subr.bf16.mxu0 0
    %725 = vmatpush1.bf16.msra.mxu0 0
    %726 = vmatprep.subr.bf16.mxu0 0
    %727 = vmatpush1.bf16.msra.mxu0 0
    %728 = vmatprep.subr.bf16.mxu0 0
    %729 = vmatpush1.bf16.msra.mxu0 0
    %730 = vmatprep.subr.bf16.mxu0 0
    %731 = vmatpush1.bf16.msra.mxu0 0
    %732 = vmatprep.subr.bf16.mxu0 0
    %733 = vmatpush1.bf16.msra.mxu0 0
    %734 = vmatprep.subr.bf16.mxu0 0
    %735 = vmatpush1.bf16.msra.mxu0 0
    %736 = vmatprep.mubr.bf16.mxu0 0
    %737 = vmatmul.mubr.bf16.gmra.mrb[0].mxu0 %v637
    %v738 = vpop.f32.mrb[0].mxu0
    %v739 = vadd.f32 %v690, %v738
    %v740 = vpop.f32.mrb[0].mxu0
    %v741 = vpop.f32.mrb[0].mxu0
    %v742 = vpop.f32.mrb[0].mxu0
    %743 = vdwg.mxu0
    %v744 = vpack.c.bf16 %v739, %v739
    %v745 = vld [vmem:[%s12] sm:$0xff]
    %v746 = vld [vmem:[%s12 + $0x8] sm:$0xff]
    %v747 = vld [vmem:[%s12 + $0x10] sm:$0xff]
    %v748 = vld [vmem:[%s12 + $0x18] sm:$0xff]
    %v749 = vld [vmem:[%s12 + $0x20] sm:$0xff]
    %v750 = vld [vmem:[%s12 + $0x28] sm:$0xff]
    %v751 = vld [vmem:[%s12 + $0x30] sm:$0xff]
    %v752 = vld [vmem:[%s12 + $0x38] sm:$0xff]
    %v753 = vld [vmem:[%s13] sm:$0xff]
    %v755 = vlaneseq
    %v756 = vshrl.u32 %v755, 7
    %v757 = vsub.s32 0, %v756
    %v758 = vrot.slane %v753, %v757
    %v759 = vlaneseq
    %v760 = vshrl.u32 %v759, 7
    %v761 = vsub.s32 1, %v760
    %v762 = vrot.slane %v753, %v761
    %v763 = vlaneseq
    %v764 = vshrl.u32 %v763, 7
    %v765 = vsub.s32 2, %v764
    %v766 = vrot.slane %v753, %v765
    %v767 = vlaneseq
    %v768 = vshrl.u32 %v767, 7
    %v769 = vsub.s32 3, %v768
    %v770 = vrot.slane %v753, %v769
    %v771 = vlaneseq
    %v772 = vshrl.u32 %v771, 7
    %v773 = vsub.s32 4, %v772
    %v774 = vrot.slane %v753, %v773
    %v775 = vlaneseq
    %v776 = vshrl.u32 %v775, 7
    %v777 = vsub.s32 5, %v776
    %v778 = vrot.slane %v753, %v777
    %v779 = vlaneseq
    %v780 = vshrl.u32 %v779, 7
    %v781 = vsub.s32 6, %v780
    %v782 = vrot.slane %v753, %v781
    %v783 = vlaneseq
    %v784 = vshrl.u32 %v783, 7
    %v785 = vsub.s32 7, %v784
    %v786 = vrot.slane %v753, %v785
    %v803 = vunpack.c.l.b16 %v745
    %v804 = vunpack.c.h.b16 %v745
    %v805 = vunpack.c.l.b16 %v746
    %v806 = vunpack.c.h.b16 %v746
    %v807 = vunpack.c.l.b16 %v747
    %v808 = vunpack.c.h.b16 %v747
    %v809 = vunpack.c.l.b16 %v748
    %v810 = vunpack.c.h.b16 %v748
    %v811 = vunpack.c.l.b16 %v749
    %v812 = vunpack.c.h.b16 %v749
    %v813 = vunpack.c.l.b16 %v750
    %v814 = vunpack.c.h.b16 %v750
    %v815 = vunpack.c.l.b16 %v751
    %v816 = vunpack.c.h.b16 %v751
    %v817 = vunpack.c.l.b16 %v752
    %v818 = vunpack.c.h.b16 %v752
    %v819 = vpack.c.b16 %v811, %v803
    %v820 = vpack.c.b16 %v812, %v804
    %v821 = vpack.c.b16 %v813, %v805
    %v822 = vpack.c.b16 %v814, %v806
    %v823 = vpack.c.b16 %v815, %v807
    %v824 = vpack.c.b16 %v816, %v808
    %v825 = vpack.c.b16 %v817, %v809
    %v826 = vpack.c.b16 %v818, %v810
    %vm835 = vcmask 130048
    %v837 = vsel %vm835, %v744, 0
    %839 = vmatprep.subr.bf16.mxu0 %v820
    %840 = vmatpush1.bf16.msra.mxu0 %v819
    %841 = vmatprep.subr.bf16.mxu0 0
    %842 = vmatpush1.bf16.msra.mxu0 0
    %843 = vmatprep.subr.bf16.mxu0 0
    %844 = vmatpush1.bf16.msra.mxu0 0
    %845 = vmatprep.subr.bf16.mxu0 0
    %846 = vmatpush1.bf16.msra.mxu0 0
    %847 = vmatprep.subr.bf16.mxu0 0
    %848 = vmatpush1.bf16.msra.mxu0 0
    %849 = vmatprep.subr.bf16.mxu0 0
    %850 = vmatpush1.bf16.msra.mxu0 0
    %851 = vmatprep.subr.bf16.mxu0 0
    %852 = vmatpush1.bf16.msra.mxu0 0
    %853 = vmatprep.subr.bf16.mxu0 0
    %854 = vmatpush1.bf16.msra.mxu0 0
    %855 = vmatprep.subr.bf16.mxu0 0
    %856 = vmatpush1.bf16.msra.mxu0 0
    %857 = vmatprep.subr.bf16.mxu0 0
    %858 = vmatpush1.bf16.msra.mxu0 0
    %859 = vmatprep.subr.bf16.mxu0 0
    %860 = vmatpush1.bf16.msra.mxu0 0
    %861 = vmatprep.subr.bf16.mxu0 0
    %862 = vmatpush1.bf16.msra.mxu0 0
    %863 = vmatprep.subr.bf16.mxu0 0
    %864 = vmatpush1.bf16.msra.mxu0 0
    %865 = vmatprep.subr.bf16.mxu0 0
    %866 = vmatpush1.bf16.msra.mxu0 0
    %867 = vmatprep.subr.bf16.mxu0 0
    %868 = vmatpush1.bf16.msra.mxu0 0
    %869 = vmatprep.subr.bf16.mxu0 0
    %870 = vmatpush1.bf16.msra.mxu0 0
    %871 = vmatprep.mubr.bf16.mxu0 0
    %872 = vmatmul.mubr.bf16.gmra.mrb[0].mxu0 %v837
    %v873 = vpop.f32.mrb[0].mxu0
    %v874 = vadd.f32 %v758, %v873
    %v875 = vpop.f32.mrb[0].mxu0
    %v876 = vadd.f32 %v762, %v875
    %v877 = vpop.f32.mrb[0].mxu0
    %v878 = vpop.f32.mrb[0].mxu0
    %879 = vdwg.mxu0
    %880 = vmatprep.subr.bf16.mxu0 %v822
    %881 = vmatpush1.bf16.msra.mxu0 %v821
    %882 = vmatprep.subr.bf16.mxu0 0
    %883 = vmatpush1.bf16.msra.mxu0 0
    %884 = vmatprep.subr.bf16.mxu0 0
    %885 = vmatpush1.bf16.msra.mxu0 0
    %886 = vmatprep.subr.bf16.mxu0 0
    %887 = vmatpush1.bf16.msra.mxu0 0
    %888 = vmatprep.subr.bf16.mxu0 0
    %889 = vmatpush1.bf16.msra.mxu0 0
    %890 = vmatprep.subr.bf16.mxu0 0
    %891 = vmatpush1.bf16.msra.mxu0 0
    %892 = vmatprep.subr.bf16.mxu0 0
    %893 = vmatpush1.bf16.msra.mxu0 0
    %894 = vmatprep.subr.bf16.mxu0 0
    %895 = vmatpush1.bf16.msra.mxu0 0
    %896 = vmatprep.subr.bf16.mxu0 0
    %897 = vmatpush1.bf16.msra.mxu0 0
    %898 = vmatprep.subr.bf16.mxu0 0
    %899 = vmatpush1.bf16.msra.mxu0 0
    %900 = vmatprep.subr.bf16.mxu0 0
    %901 = vmatpush1.bf16.msra.mxu0 0
    %902 = vmatprep.subr.bf16.mxu0 0
    %903 = vmatpush1.bf16.msra.mxu0 0
    %904 = vmatprep.subr.bf16.mxu0 0
    %905 = vmatpush1.bf16.msra.mxu0 0
    %906 = vmatprep.subr.bf16.mxu0 0
    %907 = vmatpush1.bf16.msra.mxu0 0
    %908 = vmatprep.subr.bf16.mxu0 0
    %909 = vmatpush1.bf16.msra.mxu0 0
    %910 = vmatprep.subr.bf16.mxu0 0
    %911 = vmatpush1.bf16.msra.mxu0 0
    %912 = vmatprep.mubr.bf16.mxu0 0
    %913 = vmatmul.mubr.bf16.gmra.mrb[0].mxu0 %v837
    %v914 = vpop.f32.mrb[0].mxu0
    %v915 = vadd.f32 %v766, %v914
    %v916 = vpop.f32.mrb[0].mxu0
    %v917 = vadd.f32 %v770, %v916
    %v918 = vpop.f32.mrb[0].mxu0
    %v919 = vpop.f32.mrb[0].mxu0
    %920 = vdwg.mxu0
    %921 = vmatprep.subr.bf16.mxu0 %v824
    %922 = vmatpush1.bf16.msra.mxu0 %v823
    %923 = vmatprep.subr.bf16.mxu0 0
    %924 = vmatpush1.bf16.msra.mxu0 0
    %925 = vmatprep.subr.bf16.mxu0 0
    %926 = vmatpush1.bf16.msra.mxu0 0
    %927 = vmatprep.subr.bf16.mxu0 0
    %928 = vmatpush1.bf16.msra.mxu0 0
    %929 = vmatprep.subr.bf16.mxu0 0
    %930 = vmatpush1.bf16.msra.mxu0 0
    %931 = vmatprep.subr.bf16.mxu0 0
    %932 = vmatpush1.bf16.msra.mxu0 0
    %933 = vmatprep.subr.bf16.mxu0 0
    %934 = vmatpush1.bf16.msra.mxu0 0
    %935 = vmatprep.subr.bf16.mxu0 0
    %936 = vmatpush1.bf16.msra.mxu0 0
    %937 = vmatprep.subr.bf16.mxu0 0
    %938 = vmatpush1.bf16.msra.mxu0 0
    %939 = vmatprep.subr.bf16.mxu0 0
    %940 = vmatpush1.bf16.msra.mxu0 0
    %941 = vmatprep.subr.bf16.mxu0 0
    %942 = vmatpush1.bf16.msra.mxu0 0
    %943 = vmatprep.subr.bf16.mxu0 0
    %944 = vmatpush1.bf16.msra.mxu0 0
    %945 = vmatprep.subr.bf16.mxu0 0
    %946 = vmatpush1.bf16.msra.mxu0 0
    %947 = vmatprep.subr.bf16.mxu0 0
    %948 = vmatpush1.bf16.msra.mxu0 0
    %949 = vmatprep.subr.bf16.mxu0 0
    %950 = vmatpush1.bf16.msra.mxu0 0
    %951 = vmatprep.subr.bf16.mxu0 0
    %952 = vmatpush1.bf16.msra.mxu0 0
    %953 = vmatprep.mubr.bf16.mxu0 0
    %954 = vmatmul.mubr.bf16.gmra.mrb[0].mxu0 %v837
    %v955 = vpop.f32.mrb[0].mxu0
    %v956 = vadd.f32 %v774, %v955
    %v957 = vpop.f32.mrb[0].mxu0
    %v958 = vadd.f32 %v778, %v957
    %v959 = vpop.f32.mrb[0].mxu0
    %v960 = vpop.f32.mrb[0].mxu0
    %961 = vdwg.mxu0
    %962 = vmatprep.subr.bf16.mxu0 %v826
    %963 = vmatpush1.bf16.msra.mxu0 %v825
    %964 = vmatprep.subr.bf16.mxu0 0
    %965 = vmatpush1.bf16.msra.mxu0 0
    %966 = vmatprep.subr.bf16.mxu0 0
    %967 = vmatpush1.bf16.msra.mxu0 0
    %968 = vmatprep.subr.bf16.mxu0 0
    %969 = vmatpush1.bf16.msra.mxu0 0
    %970 = vmatprep.subr.bf16.mxu0 0
    %971 = vmatpush1.bf16.msra.mxu0 0
    %972 = vmatprep.subr.bf16.mxu0 0
    %973 = vmatpush1.bf16.msra.mxu0 0
    %974 = vmatprep.subr.bf16.mxu0 0
    %975 = vmatpush1.bf16.msra.mxu0 0
    %976 = vmatprep.subr.bf16.mxu0 0
    %977 = vmatpush1.bf16.msra.mxu0 0
    %978 = vmatprep.subr.bf16.mxu0 0
    %979 = vmatpush1.bf16.msra.mxu0 0
    %980 = vmatprep.subr.bf16.mxu0 0
    %981 = vmatpush1.bf16.msra.mxu0 0
    %982 = vmatprep.subr.bf16.mxu0 0
    %983 = vmatpush1.bf16.msra.mxu0 0
    %984 = vmatprep.subr.bf16.mxu0 0
    %985 = vmatpush1.bf16.msra.mxu0 0
    %986 = vmatprep.subr.bf16.mxu0 0
    %987 = vmatpush1.bf16.msra.mxu0 0
    %988 = vmatprep.subr.bf16.mxu0 0
    %989 = vmatpush1.bf16.msra.mxu0 0
    %990 = vmatprep.subr.bf16.mxu0 0
    %991 = vmatpush1.bf16.msra.mxu0 0
    %992 = vmatprep.subr.bf16.mxu0 0
    %993 = vmatpush1.bf16.msra.mxu0 0
    %994 = vmatprep.mubr.bf16.mxu0 0
    %995 = vmatmul.mubr.bf16.gmra.mrb[0].mxu0 %v837
    %v996 = vpop.f32.mrb[0].mxu0
    %v997 = vadd.f32 %v782, %v996
    %v998 = vpop.f32.mrb[0].mxu0
    %v999 = vadd.f32 %v786, %v998
    %v1000 = vpop.f32.mrb[0].mxu0
    %v1001 = vpop.f32.mrb[0].mxu0
    %1002 = vdwg.mxu0
    %v1003 = vmul.f32 %v874, 0.2
    %v1004 = vmul.f32 %v876, 0.2
    %v1005 = vmul.f32 %v915, 0.2
    %v1006 = vmul.f32 %v917, 0.2
    %v1007 = vmul.f32 %v956, 0.2
    %v1008 = vmul.f32 %v958, 0.2
    %v1009 = vmul.f32 %v997, 0.2
    %v1010 = vmul.f32 %v999, 0.2
    %v1011 = vmax.f32 %v874, %v1003
    %v1012 = vmax.f32 %v876, %v1004
    %v1013 = vmax.f32 %v915, %v1005
    %v1014 = vmax.f32 %v917, %v1006
    %v1015 = vmax.f32 %v956, %v1007
    %v1016 = vmax.f32 %v958, %v1008
    %v1017 = vmax.f32 %v997, %v1009
    %v1018 = vmax.f32 %v999, %v1010
    %v1019 = vpack.c.bf16 %v1011, %v1011
    %v1020 = vpack.c.bf16 %v1012, %v1012
    %v1021 = vpack.c.bf16 %v1013, %v1013
    %v1022 = vpack.c.bf16 %v1014, %v1014
    %v1023 = vpack.c.bf16 %v1015, %v1015
    %v1024 = vpack.c.bf16 %v1016, %v1016
    %v1025 = vpack.c.bf16 %v1017, %v1017
    %v1026 = vpack.c.bf16 %v1018, %v1018
    %v1027 = vld [vmem:[%s14] sm:$0xff]
    %v1028 = vld [vmem:[%s14 + $0x8] sm:$0xff]
    %v1029 = vld [vmem:[%s14 + $0x10] sm:$0xff]
    %v1030 = vld [vmem:[%s14 + $0x18] sm:$0xff]
    %v1031 = vld [vmem:[%s14 + $0x20] sm:$0xff]
    %v1032 = vld [vmem:[%s14 + $0x28] sm:$0xff]
    %v1033 = vld [vmem:[%s14 + $0x30] sm:$0xff]
    %v1034 = vld [vmem:[%s14 + $0x38] sm:$0xff]
    %v1035 = vld [vmem:[%s14 + $0x40] sm:$0xff]
    %v1036 = vld [vmem:[%s14 + $0x48] sm:$0xff]
    %v1037 = vld [vmem:[%s14 + $0x50] sm:$0xff]
    %v1038 = vld [vmem:[%s14 + $0x58] sm:$0xff]
    %v1039 = vld [vmem:[%s14 + $0x60] sm:$0xff]
    %v1040 = vld [vmem:[%s14 + $0x68] sm:$0xff]
    %v1041 = vld [vmem:[%s14 + $0x70] sm:$0xff]
    %v1042 = vld [vmem:[%s14 + $0x78] sm:$0xff]
    %v1043 = vld [vmem:[%s14 + $0x80] sm:$0xff]
    %v1044 = vld [vmem:[%s14 + $0x88] sm:$0xff]
    %v1045 = vld [vmem:[%s14 + $0x90] sm:$0xff]
    %v1046 = vld [vmem:[%s14 + $0x98] sm:$0xff]
    %v1047 = vld [vmem:[%s14 + $0xa0] sm:$0xff]
    %v1048 = vld [vmem:[%s14 + $0xa8] sm:$0xff]
    %v1049 = vld [vmem:[%s14 + $0xb0] sm:$0xff]
    %v1050 = vld [vmem:[%s14 + $0xb8] sm:$0xff]
    %v1051 = vld [vmem:[%s14 + $0xc0] sm:$0xff]
    %v1052 = vld [vmem:[%s14 + $0xc8] sm:$0xff]
    %v1053 = vld [vmem:[%s14 + $0xd0] sm:$0xff]
    %v1054 = vld [vmem:[%s14 + $0xd8] sm:$0xff]
    %v1055 = vld [vmem:[%s14 + $0xe0] sm:$0xff]
    %v1056 = vld [vmem:[%s14 + $0xe8] sm:$0xff]
    %v1057 = vld [vmem:[%s14 + $0xf0] sm:$0xff]
    %v1058 = vld [vmem:[%s14 + $0xf8] sm:$0xff]
    %v1059 = vld [vmem:[%s14 + $0x100] sm:$0xff]
    %v1060 = vld [vmem:[%s14 + $0x108] sm:$0xff]
    %v1061 = vld [vmem:[%s14 + $0x110] sm:$0xff]
    %v1062 = vld [vmem:[%s14 + $0x118] sm:$0xff]
    %v1063 = vld [vmem:[%s14 + $0x120] sm:$0xff]
    %v1064 = vld [vmem:[%s14 + $0x128] sm:$0xff]
    %v1065 = vld [vmem:[%s14 + $0x130] sm:$0xff]
    %v1066 = vld [vmem:[%s14 + $0x138] sm:$0xff]
    %v1067 = vld [vmem:[%s14 + $0x140] sm:$0xff]
    %v1068 = vld [vmem:[%s14 + $0x148] sm:$0xff]
    %v1069 = vld [vmem:[%s14 + $0x150] sm:$0xff]
    %v1070 = vld [vmem:[%s14 + $0x158] sm:$0xff]
    %v1071 = vld [vmem:[%s14 + $0x160] sm:$0xff]
    %v1072 = vld [vmem:[%s14 + $0x168] sm:$0xff]
    %v1073 = vld [vmem:[%s14 + $0x170] sm:$0xff]
    %v1074 = vld [vmem:[%s14 + $0x178] sm:$0xff]
    %v1075 = vld [vmem:[%s14 + $0x180] sm:$0xff]
    %v1076 = vld [vmem:[%s14 + $0x188] sm:$0xff]
    %v1077 = vld [vmem:[%s14 + $0x190] sm:$0xff]
    %v1078 = vld [vmem:[%s14 + $0x198] sm:$0xff]
    %v1079 = vld [vmem:[%s14 + $0x1a0] sm:$0xff]
    %v1080 = vld [vmem:[%s14 + $0x1a8] sm:$0xff]
    %v1081 = vld [vmem:[%s14 + $0x1b0] sm:$0xff]
    %v1082 = vld [vmem:[%s14 + $0x1b8] sm:$0xff]
    %v1083 = vld [vmem:[%s14 + $0x1c0] sm:$0xff]
    %v1084 = vld [vmem:[%s14 + $0x1c8] sm:$0xff]
    %v1085 = vld [vmem:[%s14 + $0x1d0] sm:$0xff]
    %v1086 = vld [vmem:[%s14 + $0x1d8] sm:$0xff]
    %v1087 = vld [vmem:[%s14 + $0x1e0] sm:$0xff]
    %v1088 = vld [vmem:[%s14 + $0x1e8] sm:$0xff]
    %v1089 = vld [vmem:[%s14 + $0x1f0] sm:$0xff]
    %v1090 = vld [vmem:[%s14 + $0x1f8] sm:$0xff]
    %v1091 = vld [vmem:[%s14 + $0x200] sm:$0xff]
    %v1092 = vld [vmem:[%s14 + $0x208] sm:$0xff]
    %v1093 = vld [vmem:[%s14 + $0x210] sm:$0xff]
    %v1094 = vld [vmem:[%s14 + $0x218] sm:$0xff]
    %v1095 = vld [vmem:[%s14 + $0x220] sm:$0xff]
    %v1096 = vld [vmem:[%s14 + $0x228] sm:$0xff]
    %v1097 = vld [vmem:[%s14 + $0x230] sm:$0xff]
    %v1098 = vld [vmem:[%s14 + $0x238] sm:$0xff]
    %v1099 = vld [vmem:[%s14 + $0x240] sm:$0xff]
    %v1100 = vld [vmem:[%s14 + $0x248] sm:$0xff]
    %v1101 = vld [vmem:[%s14 + $0x250] sm:$0xff]
    %v1102 = vld [vmem:[%s14 + $0x258] sm:$0xff]
    %v1103 = vld [vmem:[%s14 + $0x260] sm:$0xff]
    %v1104 = vld [vmem:[%s14 + $0x268] sm:$0xff]
    %v1105 = vld [vmem:[%s14 + $0x270] sm:$0xff]
    %v1106 = vld [vmem:[%s14 + $0x278] sm:$0xff]
    %v1107 = vld [vmem:[%s14 + $0x280] sm:$0xff]
    %v1108 = vld [vmem:[%s14 + $0x288] sm:$0xff]
    %v1109 = vld [vmem:[%s14 + $0x290] sm:$0xff]
    %v1110 = vld [vmem:[%s14 + $0x298] sm:$0xff]
    %v1111 = vld [vmem:[%s14 + $0x2a0] sm:$0xff]
    %v1112 = vld [vmem:[%s14 + $0x2a8] sm:$0xff]
    %v1113 = vld [vmem:[%s14 + $0x2b0] sm:$0xff]
    %v1114 = vld [vmem:[%s14 + $0x2b8] sm:$0xff]
    %v1115 = vld [vmem:[%s14 + $0x2c0] sm:$0xff]
    %v1116 = vld [vmem:[%s14 + $0x2c8] sm:$0xff]
    %v1117 = vld [vmem:[%s14 + $0x2d0] sm:$0xff]
    %v1118 = vld [vmem:[%s14 + $0x2d8] sm:$0xff]
    %v1119 = vld [vmem:[%s14 + $0x2e0] sm:$0xff]
    %v1120 = vld [vmem:[%s14 + $0x2e8] sm:$0xff]
    %v1121 = vld [vmem:[%s14 + $0x2f0] sm:$0xff]
    %v1122 = vld [vmem:[%s14 + $0x2f8] sm:$0xff]
    %v1123 = vld [vmem:[%s14 + $0x300] sm:$0xff]
    %v1124 = vld [vmem:[%s14 + $0x308] sm:$0xff]
    %v1125 = vld [vmem:[%s14 + $0x310] sm:$0xff]
    %v1126 = vld [vmem:[%s14 + $0x318] sm:$0xff]
    %v1127 = vld [vmem:[%s14 + $0x320] sm:$0xff]
    %v1128 = vld [vmem:[%s14 + $0x328] sm:$0xff]
    %v1129 = vld [vmem:[%s14 + $0x330] sm:$0xff]
    %v1130 = vld [vmem:[%s14 + $0x338] sm:$0xff]
    %v1131 = vld [vmem:[%s14 + $0x340] sm:$0xff]
    %v1132 = vld [vmem:[%s14 + $0x348] sm:$0xff]
    %v1133 = vld [vmem:[%s14 + $0x350] sm:$0xff]
    %v1134 = vld [vmem:[%s14 + $0x358] sm:$0xff]
    %v1135 = vld [vmem:[%s14 + $0x360] sm:$0xff]
    %v1136 = vld [vmem:[%s14 + $0x368] sm:$0xff]
    %v1137 = vld [vmem:[%s14 + $0x370] sm:$0xff]
    %v1138 = vld [vmem:[%s14 + $0x378] sm:$0xff]
    %v1139 = vld [vmem:[%s14 + $0x380] sm:$0xff]
    %v1140 = vld [vmem:[%s14 + $0x388] sm:$0xff]
    %v1141 = vld [vmem:[%s14 + $0x390] sm:$0xff]
    %v1142 = vld [vmem:[%s14 + $0x398] sm:$0xff]
    %v1143 = vld [vmem:[%s14 + $0x3a0] sm:$0xff]
    %v1144 = vld [vmem:[%s14 + $0x3a8] sm:$0xff]
    %v1145 = vld [vmem:[%s14 + $0x3b0] sm:$0xff]
    %v1146 = vld [vmem:[%s14 + $0x3b8] sm:$0xff]
    %v1147 = vld [vmem:[%s14 + $0x3c0] sm:$0xff]
    %v1148 = vld [vmem:[%s14 + $0x3c8] sm:$0xff]
    %v1149 = vld [vmem:[%s14 + $0x3d0] sm:$0xff]
    %v1150 = vld [vmem:[%s14 + $0x3d8] sm:$0xff]
    %v1151 = vld [vmem:[%s14 + $0x3e0] sm:$0xff]
    %v1152 = vld [vmem:[%s14 + $0x3e8] sm:$0xff]
    %v1153 = vld [vmem:[%s14 + $0x3f0] sm:$0xff]
    %v1154 = vld [vmem:[%s14 + $0x3f8] sm:$0xff]
    %v1155 = vld [vmem:[%s15] sm:$0x3]
    %v1157 = vlaneseq
    %v1158 = vshrl.u32 %v1157, 7
    %v1159 = vsub.s32 0, %v1158
    %v1160 = vrot.slane %v1155, %v1159
    %v1161 = vlaneseq
    %v1162 = vshrl.u32 %v1161, 7
    %v1163 = vsub.s32 1, %v1162
    %v1164 = vrot.slane %v1155, %v1163
    %v1295 = vunpack.c.l.b16 %v1027
    %v1296 = vunpack.c.h.b16 %v1027
    %v1297 = vunpack.c.l.b16 %v1028
    %v1298 = vunpack.c.h.b16 %v1028
    %v1299 = vunpack.c.l.b16 %v1029
    %v1300 = vunpack.c.h.b16 %v1029
    %v1301 = vunpack.c.l.b16 %v1030
    %v1302 = vunpack.c.h.b16 %v1030
    %v1303 = vunpack.c.l.b16 %v1031
    %v1304 = vunpack.c.h.b16 %v1031
    %v1305 = vunpack.c.l.b16 %v1032
    %v1306 = vunpack.c.h.b16 %v1032
    %v1307 = vunpack.c.l.b16 %v1033
    %v1308 = vunpack.c.h.b16 %v1033
    %v1309 = vunpack.c.l.b16 %v1034
    %v1310 = vunpack.c.h.b16 %v1034
    %v1311 = vunpack.c.l.b16 %v1035
    %v1312 = vunpack.c.h.b16 %v1035
    %v1313 = vunpack.c.l.b16 %v1036
    %v1314 = vunpack.c.h.b16 %v1036
    %v1315 = vunpack.c.l.b16 %v1037
    %v1316 = vunpack.c.h.b16 %v1037
    %v1317 = vunpack.c.l.b16 %v1038
    %v1318 = vunpack.c.h.b16 %v1038
    %v1319 = vunpack.c.l.b16 %v1039
    %v1320 = vunpack.c.h.b16 %v1039
    %v1321 = vunpack.c.l.b16 %v1040
    %v1322 = vunpack.c.h.b16 %v1040
    %v1323 = vunpack.c.l.b16 %v1041
    %v1324 = vunpack.c.h.b16 %v1041
    %v1325 = vunpack.c.l.b16 %v1042
    %v1326 = vunpack.c.h.b16 %v1042
    %v1327 = vunpack.c.l.b16 %v1043
    %v1328 = vunpack.c.h.b16 %v1043
    %v1329 = vunpack.c.l.b16 %v1044
    %v1330 = vunpack.c.h.b16 %v1044
    %v1331 = vunpack.c.l.b16 %v1045
    %v1332 = vunpack.c.h.b16 %v1045
    %v1333 = vunpack.c.l.b16 %v1046
    %v1334 = vunpack.c.h.b16 %v1046
    %v1335 = vunpack.c.l.b16 %v1047
    %v1336 = vunpack.c.h.b16 %v1047
    %v1337 = vunpack.c.l.b16 %v1048
    %v1338 = vunpack.c.h.b16 %v1048
    %v1339 = vunpack.c.l.b16 %v1049
    %v1340 = vunpack.c.h.b16 %v1049
    %v1341 = vunpack.c.l.b16 %v1050
    %v1342 = vunpack.c.h.b16 %v1050
    %v1343 = vunpack.c.l.b16 %v1051
    %v1344 = vunpack.c.h.b16 %v1051
    %v1345 = vunpack.c.l.b16 %v1052
    %v1346 = vunpack.c.h.b16 %v1052
    %v1347 = vunpack.c.l.b16 %v1053
    %v1348 = vunpack.c.h.b16 %v1053
    %v1349 = vunpack.c.l.b16 %v1054
    %v1350 = vunpack.c.h.b16 %v1054
    %v1351 = vunpack.c.l.b16 %v1055
    %v1352 = vunpack.c.h.b16 %v1055
    %v1353 = vunpack.c.l.b16 %v1056
    %v1354 = vunpack.c.h.b16 %v1056
    %v1355 = vunpack.c.l.b16 %v1057
    %v1356 = vunpack.c.h.b16 %v1057
    %v1357 = vunpack.c.l.b16 %v1058
    %v1358 = vunpack.c.h.b16 %v1058
    %v1359 = vunpack.c.l.b16 %v1059
    %v1360 = vunpack.c.h.b16 %v1059
    %v1361 = vunpack.c.l.b16 %v1060
    %v1362 = vunpack.c.h.b16 %v1060
    %v1363 = vunpack.c.l.b16 %v1061
    %v1364 = vunpack.c.h.b16 %v1061
    %v1365 = vunpack.c.l.b16 %v1062
    %v1366 = vunpack.c.h.b16 %v1062
    %v1367 = vunpack.c.l.b16 %v1063
    %v1368 = vunpack.c.h.b16 %v1063
    %v1369 = vunpack.c.l.b16 %v1064
    %v1370 = vunpack.c.h.b16 %v1064
    %v1371 = vunpack.c.l.b16 %v1065
    %v1372 = vunpack.c.h.b16 %v1065
    %v1373 = vunpack.c.l.b16 %v1066
    %v1374 = vunpack.c.h.b16 %v1066
    %v1375 = vunpack.c.l.b16 %v1067
    %v1376 = vunpack.c.h.b16 %v1067
    %v1377 = vunpack.c.l.b16 %v1068
    %v1378 = vunpack.c.h.b16 %v1068
    %v1379 = vunpack.c.l.b16 %v1069
    %v1380 = vunpack.c.h.b16 %v1069
    %v1381 = vunpack.c.l.b16 %v1070
    %v1382 = vunpack.c.h.b16 %v1070
    %v1383 = vunpack.c.l.b16 %v1071
    %v1384 = vunpack.c.h.b16 %v1071
    %v1385 = vunpack.c.l.b16 %v1072
    %v1386 = vunpack.c.h.b16 %v1072
    %v1387 = vunpack.c.l.b16 %v1073
    %v1388 = vunpack.c.h.b16 %v1073
    %v1389 = vunpack.c.l.b16 %v1074
    %v1390 = vunpack.c.h.b16 %v1074
    %v1391 = vunpack.c.l.b16 %v1075
    %v1392 = vunpack.c.h.b16 %v1075
    %v1393 = vunpack.c.l.b16 %v1076
    %v1394 = vunpack.c.h.b16 %v1076
    %v1395 = vunpack.c.l.b16 %v1077
    %v1396 = vunpack.c.h.b16 %v1077
    %v1397 = vunpack.c.l.b16 %v1078
    %v1398 = vunpack.c.h.b16 %v1078
    %v1399 = vunpack.c.l.b16 %v1079
    %v1400 = vunpack.c.h.b16 %v1079
    %v1401 = vunpack.c.l.b16 %v1080
    %v1402 = vunpack.c.h.b16 %v1080
    %v1403 = vunpack.c.l.b16 %v1081
    %v1404 = vunpack.c.h.b16 %v1081
    %v1405 = vunpack.c.l.b16 %v1082
    %v1406 = vunpack.c.h.b16 %v1082
    %v1407 = vunpack.c.l.b16 %v1083
    %v1408 = vunpack.c.h.b16 %v1083
    %v1409 = vunpack.c.l.b16 %v1084
    %v1410 = vunpack.c.h.b16 %v1084
    %v1411 = vunpack.c.l.b16 %v1085
    %v1412 = vunpack.c.h.b16 %v1085
    %v1413 = vunpack.c.l.b16 %v1086
    %v1414 = vunpack.c.h.b16 %v1086
    %v1415 = vunpack.c.l.b16 %v1087
    %v1416 = vunpack.c.h.b16 %v1087
    %v1417 = vunpack.c.l.b16 %v1088
    %v1418 = vunpack.c.h.b16 %v1088
    %v1419 = vunpack.c.l.b16 %v1089
    %v1420 = vunpack.c.h.b16 %v1089
    %v1421 = vunpack.c.l.b16 %v1090
    %v1422 = vunpack.c.h.b16 %v1090
    %v1423 = vunpack.c.l.b16 %v1091
    %v1424 = vunpack.c.h.b16 %v1091
    %v1425 = vunpack.c.l.b16 %v1092
    %v1426 = vunpack.c.h.b16 %v1092
    %v1427 = vunpack.c.l.b16 %v1093
    %v1428 = vunpack.c.h.b16 %v1093
    %v1429 = vunpack.c.l.b16 %v1094
    %v1430 = vunpack.c.h.b16 %v1094
    %v1431 = vunpack.c.l.b16 %v1095
    %v1432 = vunpack.c.h.b16 %v1095
    %v1433 = vunpack.c.l.b16 %v1096
    %v1434 = vunpack.c.h.b16 %v1096
    %v1435 = vunpack.c.l.b16 %v1097
    %v1436 = vunpack.c.h.b16 %v1097
    %v1437 = vunpack.c.l.b16 %v1098
    %v1438 = vunpack.c.h.b16 %v1098
    %v1439 = vunpack.c.l.b16 %v1099
    %v1440 = vunpack.c.h.b16 %v1099
    %v1441 = vunpack.c.l.b16 %v1100
    %v1442 = vunpack.c.h.b16 %v1100
    %v1443 = vunpack.c.l.b16 %v1101
    %v1444 = vunpack.c.h.b16 %v1101
    %v1445 = vunpack.c.l.b16 %v1102
    %v1446 = vunpack.c.h.b16 %v1102
    %v1447 = vunpack.c.l.b16 %v1103
    %v1448 = vunpack.c.h.b16 %v1103
    %v1449 = vunpack.c.l.b16 %v1104
    %v1450 = vunpack.c.h.b16 %v1104
    %v1451 = vunpack.c.l.b16 %v1105
    %v1452 = vunpack.c.h.b16 %v1105
    %v1453 = vunpack.c.l.b16 %v1106
    %v1454 = vunpack.c.h.b16 %v1106
    %v1455 = vunpack.c.l.b16 %v1107
    %v1456 = vunpack.c.h.b16 %v1107
    %v1457 = vunpack.c.l.b16 %v1108
    %v1458 = vunpack.c.h.b16 %v1108
    %v1459 = vunpack.c.l.b16 %v1109
    %v1460 = vunpack.c.h.b16 %v1109
    %v1461 = vunpack.c.l.b16 %v1110
    %v1462 = vunpack.c.h.b16 %v1110
    %v1463 = vunpack.c.l.b16 %v1111
    %v1464 = vunpack.c.h.b16 %v1111
    %v1465 = vunpack.c.l.b16 %v1112
    %v1466 = vunpack.c.h.b16 %v1112
    %v1467 = vunpack.c.l.b16 %v1113
    %v1468 = vunpack.c.h.b16 %v1113
    %v1469 = vunpack.c.l.b16 %v1114
    %v1470 = vunpack.c.h.b16 %v1114
    %v1471 = vunpack.c.l.b16 %v1115
    %v1472 = vunpack.c.h.b16 %v1115
    %v1473 = vunpack.c.l.b16 %v1116
    %v1474 = vunpack.c.h.b16 %v1116
    %v1475 = vunpack.c.l.b16 %v1117
    %v1476 = vunpack.c.h.b16 %v1117
    %v1477 = vunpack.c.l.b16 %v1118
    %v1478 = vunpack.c.h.b16 %v1118
    %v1479 = vunpack.c.l.b16 %v1119
    %v1480 = vunpack.c.h.b16 %v1119
    %v1481 = vunpack.c.l.b16 %v1120
    %v1482 = vunpack.c.h.b16 %v1120
    %v1483 = vunpack.c.l.b16 %v1121
    %v1484 = vunpack.c.h.b16 %v1121
    %v1485 = vunpack.c.l.b16 %v1122
    %v1486 = vunpack.c.h.b16 %v1122
    %v1487 = vunpack.c.l.b16 %v1123
    %v1488 = vunpack.c.h.b16 %v1123
    %v1489 = vunpack.c.l.b16 %v1124
    %v1490 = vunpack.c.h.b16 %v1124
    %v1491 = vunpack.c.l.b16 %v1125
    %v1492 = vunpack.c.h.b16 %v1125
    %v1493 = vunpack.c.l.b16 %v1126
    %v1494 = vunpack.c.h.b16 %v1126
    %v1495 = vunpack.c.l.b16 %v1127
    %v1496 = vunpack.c.h.b16 %v1127
    %v1497 = vunpack.c.l.b16 %v1128
    %v1498 = vunpack.c.h.b16 %v1128
    %v1499 = vunpack.c.l.b16 %v1129
    %v1500 = vunpack.c.h.b16 %v1129
    %v1501 = vunpack.c.l.b16 %v1130
    %v1502 = vunpack.c.h.b16 %v1130
    %v1503 = vunpack.c.l.b16 %v1131
    %v1504 = vunpack.c.h.b16 %v1131
    %v1505 = vunpack.c.l.b16 %v1132
    %v1506 = vunpack.c.h.b16 %v1132
    %v1507 = vunpack.c.l.b16 %v1133
    %v1508 = vunpack.c.h.b16 %v1133
    %v1509 = vunpack.c.l.b16 %v1134
    %v1510 = vunpack.c.h.b16 %v1134
    %v1511 = vunpack.c.l.b16 %v1135
    %v1512 = vunpack.c.h.b16 %v1135
    %v1513 = vunpack.c.l.b16 %v1136
    %v1514 = vunpack.c.h.b16 %v1136
    %v1515 = vunpack.c.l.b16 %v1137
    %v1516 = vunpack.c.h.b16 %v1137
    %v1517 = vunpack.c.l.b16 %v1138
    %v1518 = vunpack.c.h.b16 %v1138
    %v1519 = vunpack.c.l.b16 %v1139
    %v1520 = vunpack.c.h.b16 %v1139
    %v1521 = vunpack.c.l.b16 %v1140
    %v1522 = vunpack.c.h.b16 %v1140
    %v1523 = vunpack.c.l.b16 %v1141
    %v1524 = vunpack.c.h.b16 %v1141
    %v1525 = vunpack.c.l.b16 %v1142
    %v1526 = vunpack.c.h.b16 %v1142
    %v1527 = vunpack.c.l.b16 %v1143
    %v1528 = vunpack.c.h.b16 %v1143
    %v1529 = vunpack.c.l.b16 %v1144
    %v1530 = vunpack.c.h.b16 %v1144
    %v1531 = vunpack.c.l.b16 %v1145
    %v1532 = vunpack.c.h.b16 %v1145
    %v1533 = vunpack.c.l.b16 %v1146
    %v1534 = vunpack.c.h.b16 %v1146
    %v1535 = vunpack.c.l.b16 %v1147
    %v1536 = vunpack.c.h.b16 %v1147
    %v1537 = vunpack.c.l.b16 %v1148
    %v1538 = vunpack.c.h.b16 %v1148
    %v1539 = vunpack.c.l.b16 %v1149
    %v1540 = vunpack.c.h.b16 %v1149
    %v1541 = vunpack.c.l.b16 %v1150
    %v1542 = vunpack.c.h.b16 %v1150
    %v1543 = vunpack.c.l.b16 %v1151
    %v1544 = vunpack.c.h.b16 %v1151
    %v1545 = vunpack.c.l.b16 %v1152
    %v1546 = vunpack.c.h.b16 %v1152
    %v1547 = vunpack.c.l.b16 %v1153
    %v1548 = vunpack.c.h.b16 %v1153
    %v1549 = vunpack.c.l.b16 %v1154
    %v1550 = vunpack.c.h.b16 %v1154
    %v1551 = vpack.c.b16 %v1297, %v1295
    %v1552 = vpack.c.b16 %v1298, %v1296
    %v1553 = vpack.c.b16 %v1301, %v1299
    %v1554 = vpack.c.b16 %v1302, %v1300
    %v1555 = vpack.c.b16 %v1305, %v1303
    %v1556 = vpack.c.b16 %v1306, %v1304
    %v1557 = vpack.c.b16 %v1309, %v1307
    %v1558 = vpack.c.b16 %v1310, %v1308
    %v1559 = vpack.c.b16 %v1313, %v1311
    %v1560 = vpack.c.b16 %v1314, %v1312
    %v1561 = vpack.c.b16 %v1317, %v1315
    %v1562 = vpack.c.b16 %v1318, %v1316
    %v1563 = vpack.c.b16 %v1321, %v1319
    %v1564 = vpack.c.b16 %v1322, %v1320
    %v1565 = vpack.c.b16 %v1325, %v1323
    %v1566 = vpack.c.b16 %v1326, %v1324
    %v1567 = vpack.c.b16 %v1329, %v1327
    %v1568 = vpack.c.b16 %v1330, %v1328
    %v1569 = vpack.c.b16 %v1333, %v1331
    %v1570 = vpack.c.b16 %v1334, %v1332
    %v1571 = vpack.c.b16 %v1337, %v1335
    %v1572 = vpack.c.b16 %v1338, %v1336
    %v1573 = vpack.c.b16 %v1341, %v1339
    %v1574 = vpack.c.b16 %v1342, %v1340
    %v1575 = vpack.c.b16 %v1345, %v1343
    %v1576 = vpack.c.b16 %v1346, %v1344
    %v1577 = vpack.c.b16 %v1349, %v1347
    %v1578 = vpack.c.b16 %v1350, %v1348
    %v1579 = vpack.c.b16 %v1353, %v1351
    %v1580 = vpack.c.b16 %v1354, %v1352
    %v1581 = vpack.c.b16 %v1357, %v1355
    %v1582 = vpack.c.b16 %v1358, %v1356
    %v1583 = vpack.c.b16 %v1361, %v1359
    %v1584 = vpack.c.b16 %v1362, %v1360
    %v1585 = vpack.c.b16 %v1365, %v1363
    %v1586 = vpack.c.b16 %v1366, %v1364
    %v1587 = vpack.c.b16 %v1369, %v1367
    %v1588 = vpack.c.b16 %v1370, %v1368
    %v1589 = vpack.c.b16 %v1373, %v1371
    %v1590 = vpack.c.b16 %v1374, %v1372
    %v1591 = vpack.c.b16 %v1377, %v1375
    %v1592 = vpack.c.b16 %v1378, %v1376
    %v1593 = vpack.c.b16 %v1381, %v1379
    %v1594 = vpack.c.b16 %v1382, %v1380
    %v1595 = vpack.c.b16 %v1385, %v1383
    %v1596 = vpack.c.b16 %v1386, %v1384
    %v1597 = vpack.c.b16 %v1389, %v1387
    %v1598 = vpack.c.b16 %v1390, %v1388
    %v1599 = vpack.c.b16 %v1393, %v1391
    %v1600 = vpack.c.b16 %v1394, %v1392
    %v1601 = vpack.c.b16 %v1397, %v1395
    %v1602 = vpack.c.b16 %v1398, %v1396
    %v1603 = vpack.c.b16 %v1401, %v1399
    %v1604 = vpack.c.b16 %v1402, %v1400
    %v1605 = vpack.c.b16 %v1405, %v1403
    %v1606 = vpack.c.b16 %v1406, %v1404
    %v1607 = vpack.c.b16 %v1409, %v1407
    %v1608 = vpack.c.b16 %v1410, %v1408
    %v1609 = vpack.c.b16 %v1413, %v1411
    %v1610 = vpack.c.b16 %v1414, %v1412
    %v1611 = vpack.c.b16 %v1417, %v1415
    %v1612 = vpack.c.b16 %v1418, %v1416
    %v1613 = vpack.c.b16 %v1421, %v1419
    %v1614 = vpack.c.b16 %v1422, %v1420
    %v1615 = vpack.c.b16 %v1425, %v1423
    %v1616 = vpack.c.b16 %v1426, %v1424
    %v1617 = vpack.c.b16 %v1429, %v1427
    %v1618 = vpack.c.b16 %v1430, %v1428
    %v1619 = vpack.c.b16 %v1433, %v1431
    %v1620 = vpack.c.b16 %v1434, %v1432
    %v1621 = vpack.c.b16 %v1437, %v1435
    %v1622 = vpack.c.b16 %v1438, %v1436
    %v1623 = vpack.c.b16 %v1441, %v1439
    %v1624 = vpack.c.b16 %v1442, %v1440
    %v1625 = vpack.c.b16 %v1445, %v1443
    %v1626 = vpack.c.b16 %v1446, %v1444
    %v1627 = vpack.c.b16 %v1449, %v1447
    %v1628 = vpack.c.b16 %v1450, %v1448
    %v1629 = vpack.c.b16 %v1453, %v1451
    %v1630 = vpack.c.b16 %v1454, %v1452
    %v1631 = vpack.c.b16 %v1457, %v1455
    %v1632 = vpack.c.b16 %v1458, %v1456
    %v1633 = vpack.c.b16 %v1461, %v1459
    %v1634 = vpack.c.b16 %v1462, %v1460
    %v1635 = vpack.c.b16 %v1465, %v1463
    %v1636 = vpack.c.b16 %v1466, %v1464
    %v1637 = vpack.c.b16 %v1469, %v1467
    %v1638 = vpack.c.b16 %v1470, %v1468
    %v1639 = vpack.c.b16 %v1473, %v1471
    %v1640 = vpack.c.b16 %v1474, %v1472
    %v1641 = vpack.c.b16 %v1477, %v1475
    %v1642 = vpack.c.b16 %v1478, %v1476
    %v1643 = vpack.c.b16 %v1481, %v1479
    %v1644 = vpack.c.b16 %v1482, %v1480
    %v1645 = vpack.c.b16 %v1485, %v1483
    %v1646 = vpack.c.b16 %v1486, %v1484
    %v1647 = vpack.c.b16 %v1489, %v1487
    %v1648 = vpack.c.b16 %v1490, %v1488
    %v1649 = vpack.c.b16 %v1493, %v1491
    %v1650 = vpack.c.b16 %v1494, %v1492
    %v1651 = vpack.c.b16 %v1497, %v1495
    %v1652 = vpack.c.b16 %v1498, %v1496
    %v1653 = vpack.c.b16 %v1501, %v1499
    %v1654 = vpack.c.b16 %v1502, %v1500
    %v1655 = vpack.c.b16 %v1505, %v1503
    %v1656 = vpack.c.b16 %v1506, %v1504
    %v1657 = vpack.c.b16 %v1509, %v1507
    %v1658 = vpack.c.b16 %v1510, %v1508
    %v1659 = vpack.c.b16 %v1513, %v1511
    %v1660 = vpack.c.b16 %v1514, %v1512
    %v1661 = vpack.c.b16 %v1517, %v1515
    %v1662 = vpack.c.b16 %v1518, %v1516
    %v1663 = vpack.c.b16 %v1521, %v1519
    %v1664 = vpack.c.b16 %v1522, %v1520
    %v1665 = vpack.c.b16 %v1525, %v1523
    %v1666 = vpack.c.b16 %v1526, %v1524
    %v1667 = vpack.c.b16 %v1529, %v1527
    %v1668 = vpack.c.b16 %v1530, %v1528
    %v1669 = vpack.c.b16 %v1533, %v1531
    %v1670 = vpack.c.b16 %v1534, %v1532
    %v1671 = vpack.c.b16 %v1537, %v1535
    %v1672 = vpack.c.b16 %v1538, %v1536
    %v1673 = vpack.c.b16 %v1541, %v1539
    %v1674 = vpack.c.b16 %v1542, %v1540
    %v1675 = vpack.c.b16 %v1545, %v1543
    %v1676 = vpack.c.b16 %v1546, %v1544
    %v1677 = vpack.c.b16 %v1549, %v1547
    %v1678 = vpack.c.b16 %v1550, %v1548
    %1807 = vmatprep.subr.bf16.mxu0 %v1552
    %1808 = vmatpush1.bf16.msra.mxu0 %v1551
    %1809 = vmatprep.subr.bf16.mxu0 %v1554
    %1810 = vmatpush1.bf16.msra.mxu0 %v1553
    %1811 = vmatprep.subr.bf16.mxu0 %v1556
    %1812 = vmatpush1.bf16.msra.mxu0 %v1555
    %1813 = vmatprep.subr.bf16.mxu0 %v1558
    %1814 = vmatpush1.bf16.msra.mxu0 %v1557
    %1815 = vmatprep.subr.bf16.mxu0 %v1560
    %1816 = vmatpush1.bf16.msra.mxu0 %v1559
    %1817 = vmatprep.subr.bf16.mxu0 %v1562
    %1818 = vmatpush1.bf16.msra.mxu0 %v1561
    %1819 = vmatprep.subr.bf16.mxu0 %v1564
    %1820 = vmatpush1.bf16.msra.mxu0 %v1563
    %1821 = vmatprep.subr.bf16.mxu0 %v1566
    %1822 = vmatpush1.bf16.msra.mxu0 %v1565
    %1823 = vmatprep.subr.bf16.mxu0 %v1568
    %1824 = vmatpush1.bf16.msra.mxu0 %v1567
    %1825 = vmatprep.subr.bf16.mxu0 %v1570
    %1826 = vmatpush1.bf16.msra.mxu0 %v1569
    %1827 = vmatprep.subr.bf16.mxu0 %v1572
    %1828 = vmatpush1.bf16.msra.mxu0 %v1571
    %1829 = vmatprep.subr.bf16.mxu0 %v1574
    %1830 = vmatpush1.bf16.msra.mxu0 %v1573
    %1831 = vmatprep.subr.bf16.mxu0 %v1576
    %1832 = vmatpush1.bf16.msra.mxu0 %v1575
    %1833 = vmatprep.subr.bf16.mxu0 %v1578
    %1834 = vmatpush1.bf16.msra.mxu0 %v1577
    %1835 = vmatprep.subr.bf16.mxu0 %v1580
    %1836 = vmatpush1.bf16.msra.mxu0 %v1579
    %1837 = vmatprep.subr.bf16.mxu0 %v1582
    %1838 = vmatpush1.bf16.msra.mxu0 %v1581
    %1839 = vmatprep.mubr.bf16.mxu0 %v1020
    %1840 = vmatmul.mubr.bf16.gmra.mrb[0].mxu0 %v1019
    %v1841 = vpop.f32.mrb[0].mxu0
    %v1842 = vadd.f32 %v1160, %v1841
    %v1843 = vpop.f32.mrb[0].mxu0
    %v1844 = vadd.f32 %v1164, %v1843
    %v1845 = vpop.f32.mrb[0].mxu0
    %v1846 = vpop.f32.mrb[0].mxu0
    %1847 = vdwg.mxu0
    %1848 = vmatprep.subr.bf16.mxu0 %v1584
    %1849 = vmatpush1.bf16.msra.mxu0 %v1583
    %1850 = vmatprep.subr.bf16.mxu0 %v1586
    %1851 = vmatpush1.bf16.msra.mxu0 %v1585
    %1852 = vmatprep.subr.bf16.mxu0 %v1588
    %1853 = vmatpush1.bf16.msra.mxu0 %v1587
    %1854 = vmatprep.subr.bf16.mxu0 %v1590
    %1855 = vmatpush1.bf16.msra.mxu0 %v1589
    %1856 = vmatprep.subr.bf16.mxu0 %v1592
    %1857 = vmatpush1.bf16.msra.mxu0 %v1591
    %1858 = vmatprep.subr.bf16.mxu0 %v1594
    %1859 = vmatpush1.bf16.msra.mxu0 %v1593
    %1860 = vmatprep.subr.bf16.mxu0 %v1596
    %1861 = vmatpush1.bf16.msra.mxu0 %v1595
    %1862 = vmatprep.subr.bf16.mxu0 %v1598
    %1863 = vmatpush1.bf16.msra.mxu0 %v1597
    %1864 = vmatprep.subr.bf16.mxu0 %v1600
    %1865 = vmatpush1.bf16.msra.mxu0 %v1599
    %1866 = vmatprep.subr.bf16.mxu0 %v1602
    %1867 = vmatpush1.bf16.msra.mxu0 %v1601
    %1868 = vmatprep.subr.bf16.mxu0 %v1604
    %1869 = vmatpush1.bf16.msra.mxu0 %v1603
    %1870 = vmatprep.subr.bf16.mxu0 %v1606
    %1871 = vmatpush1.bf16.msra.mxu0 %v1605
    %1872 = vmatprep.subr.bf16.mxu0 %v1608
    %1873 = vmatpush1.bf16.msra.mxu0 %v1607
    %1874 = vmatprep.subr.bf16.mxu0 %v1610
    %1875 = vmatpush1.bf16.msra.mxu0 %v1609
    %1876 = vmatprep.subr.bf16.mxu0 %v1612
    %1877 = vmatpush1.bf16.msra.mxu0 %v1611
    %1878 = vmatprep.subr.bf16.mxu0 %v1614
    %1879 = vmatpush1.bf16.msra.mxu0 %v1613
    %1880 = vmatprep.mubr.bf16.mxu0 %v1022
    %1881 = vmatmul.mubr.bf16.gmra.mrb[0].mxu0 %v1021
    %v1882 = vpop.f32.mrb[0].mxu0
    %v1883 = vadd.f32 %v1842, %v1882
    %v1884 = vpop.f32.mrb[0].mxu0
    %v1885 = vadd.f32 %v1844, %v1884
    %v1886 = vpop.f32.mrb[0].mxu0
    %v1887 = vpop.f32.mrb[0].mxu0
    %1888 = vdwg.mxu0
    %1889 = vmatprep.subr.bf16.mxu0 %v1616
    %1890 = vmatpush1.bf16.msra.mxu0 %v1615
    %1891 = vmatprep.subr.bf16.mxu0 %v1618
    %1892 = vmatpush1.bf16.msra.mxu0 %v1617
    %1893 = vmatprep.subr.bf16.mxu0 %v1620
    %1894 = vmatpush1.bf16.msra.mxu0 %v1619
    %1895 = vmatprep.subr.bf16.mxu0 %v1622
    %1896 = vmatpush1.bf16.msra.mxu0 %v1621
    %1897 = vmatprep.subr.bf16.mxu0 %v1624
    %1898 = vmatpush1.bf16.msra.mxu0 %v1623
    %1899 = vmatprep.subr.bf16.mxu0 %v1626
    %1900 = vmatpush1.bf16.msra.mxu0 %v1625
    %1901 = vmatprep.subr.bf16.mxu0 %v1628
    %1902 = vmatpush1.bf16.msra.mxu0 %v1627
    %1903 = vmatprep.subr.bf16.mxu0 %v1630
    %1904 = vmatpush1.bf16.msra.mxu0 %v1629
    %1905 = vmatprep.subr.bf16.mxu0 %v1632
    %1906 = vmatpush1.bf16.msra.mxu0 %v1631
    %1907 = vmatprep.subr.bf16.mxu0 %v1634
    %1908 = vmatpush1.bf16.msra.mxu0 %v1633
    %1909 = vmatprep.subr.bf16.mxu0 %v1636
    %1910 = vmatpush1.bf16.msra.mxu0 %v1635
    %1911 = vmatprep.subr.bf16.mxu0 %v1638
    %1912 = vmatpush1.bf16.msra.mxu0 %v1637
    %1913 = vmatprep.subr.bf16.mxu0 %v1640
    %1914 = vmatpush1.bf16.msra.mxu0 %v1639
    %1915 = vmatprep.subr.bf16.mxu0 %v1642
    %1916 = vmatpush1.bf16.msra.mxu0 %v1641
    %1917 = vmatprep.subr.bf16.mxu0 %v1644
    %1918 = vmatpush1.bf16.msra.mxu0 %v1643
    %1919 = vmatprep.subr.bf16.mxu0 %v1646
    %1920 = vmatpush1.bf16.msra.mxu0 %v1645
    %1921 = vmatprep.mubr.bf16.mxu0 %v1024
    %1922 = vmatmul.mubr.bf16.gmra.mrb[0].mxu0 %v1023
    %v1923 = vpop.f32.mrb[0].mxu0
    %v1924 = vadd.f32 %v1883, %v1923
    %v1925 = vpop.f32.mrb[0].mxu0
    %v1926 = vadd.f32 %v1885, %v1925
    %v1927 = vpop.f32.mrb[0].mxu0
    %v1928 = vpop.f32.mrb[0].mxu0
    %1929 = vdwg.mxu0
    %1930 = vmatprep.subr.bf16.mxu0 %v1648
    %1931 = vmatpush1.bf16.msra.mxu0 %v1647
    %1932 = vmatprep.subr.bf16.mxu0 %v1650
    %1933 = vmatpush1.bf16.msra.mxu0 %v1649
    %1934 = vmatprep.subr.bf16.mxu0 %v1652
    %1935 = vmatpush1.bf16.msra.mxu0 %v1651
    %1936 = vmatprep.subr.bf16.mxu0 %v1654
    %1937 = vmatpush1.bf16.msra.mxu0 %v1653
    %1938 = vmatprep.subr.bf16.mxu0 %v1656
    %1939 = vmatpush1.bf16.msra.mxu0 %v1655
    %1940 = vmatprep.subr.bf16.mxu0 %v1658
    %1941 = vmatpush1.bf16.msra.mxu0 %v1657
    %1942 = vmatprep.subr.bf16.mxu0 %v1660
    %1943 = vmatpush1.bf16.msra.mxu0 %v1659
    %1944 = vmatprep.subr.bf16.mxu0 %v1662
    %1945 = vmatpush1.bf16.msra.mxu0 %v1661
    %1946 = vmatprep.subr.bf16.mxu0 %v1664
    %1947 = vmatpush1.bf16.msra.mxu0 %v1663
    %1948 = vmatprep.subr.bf16.mxu0 %v1666
    %1949 = vmatpush1.bf16.msra.mxu0 %v1665
    %1950 = vmatprep.subr.bf16.mxu0 %v1668
    %1951 = vmatpush1.bf16.msra.mxu0 %v1667
    %1952 = vmatprep.subr.bf16.mxu0 %v1670
    %1953 = vmatpush1.bf16.msra.mxu0 %v1669
    %1954 = vmatprep.subr.bf16.mxu0 %v1672
    %1955 = vmatpush1.bf16.msra.mxu0 %v1671
    %1956 = vmatprep.subr.bf16.mxu0 %v1674
    %1957 = vmatpush1.bf16.msra.mxu0 %v1673
    %1958 = vmatprep.subr.bf16.mxu0 %v1676
    %1959 = vmatpush1.bf16.msra.mxu0 %v1675
    %1960 = vmatprep.subr.bf16.mxu0 %v1678
    %1961 = vmatpush1.bf16.msra.mxu0 %v1677
    %1962 = vmatprep.mubr.bf16.mxu0 %v1026
    %1963 = vmatmul.mubr.bf16.gmra.mrb[0].mxu0 %v1025
    %v1964 = vpop.f32.mrb[0].mxu0
    %v1965 = vadd.f32 %v1924, %v1964
    %v1966 = vpop.f32.mrb[0].mxu0
    %v1967 = vadd.f32 %v1926, %v1966
    %v1968 = vpop.f32.mrb[0].mxu0
    %v1969 = vpop.f32.mrb[0].mxu0
    %1970 = vdwg.mxu0
    %v1973 = vcombine.low %v1965, %v1967
    %1975 = vst [vmem:[%s24] sm:$0xff] %v1973
    %v1976 = vsel %vm609, %v608, 0.0
    %v1977 = vrot.slane %v1976, 4
    %v1978 = vadd.f32 %v1976, %v1977
    %v1979 = vrot.slane %v1978, 2
    %v1980 = vadd.f32 %v1978, %v1979
    %v1981 = vrot.slane %v1980, 1
    %v1982 = vadd.f32 %v1980, %v1981
    %v1983 = vrcp.pop 4.0
    %v1984 = vmul.f32 %v1982, %v1983
    %v1985 = vsub.f32 %v608, %v1984
    %v1986 = vmul.f32 %v1985, %v1985
    %v1987 = vsel %vm609, %v1986, 0.0
    %v1988 = vrot.slane %v1987, 4
    %v1989 = vadd.f32 %v1987, %v1988
    %v1990 = vrot.slane %v1989, 2
    %v1991 = vadd.f32 %v1989, %v1990
    %v1992 = vrot.slane %v1991, 1
    %v1993 = vadd.f32 %v1991, %v1992
    %v1994 = vrcp.pop 3.0
    %v1995 = vmul.f32 %v1993, %v1994
    %v1996 = vrsqrt.pop %v1995
    %v1997 = vmul.f32 %v1995, %v1996
    %vm1998 = vcmp.eq.f32.partialorder %v1995, inf
    %v1999 = vsel %vm1998, %v1995, %v1997
    %vm2000 = vcmp.eq.f32.partialorder %v1995, 0.0
    %v2001 = vand.u32 %v1995, 2147483648
    %v2002 = vsel %vm2000, %v2001, %v1999
    %v2003 = vld [vmem:[%s1] sm:$0xf]
    %v2004 = vsel %vm609, %v2003, 0.0
    %v2005 = vrot.slane %v2004, 4
    %v2006 = vadd.f32 %v2004, %v2005
    %v2007 = vrot.slane %v2006, 2
    %v2008 = vadd.f32 %v2006, %v2007
    %v2009 = vrot.slane %v2008, 1
    %v2010 = vadd.f32 %v2008, %v2009
    %v2011 = vmul.f32 %v2010, %v1983
    %v2012 = vsub.f32 %v2003, %v2011
    %v2013 = vmul.f32 %v2012, %v2012
    %v2014 = vsel %vm609, %v2013, 0.0
    %v2015 = vrot.slane %v2014, 4
    %v2016 = vadd.f32 %v2014, %v2015
    %v2017 = vrot.slane %v2016, 2
    %v2018 = vadd.f32 %v2016, %v2017
    %v2019 = vrot.slane %v2018, 1
    %v2020 = vadd.f32 %v2018, %v2019
    %v2021 = vmul.f32 %v2020, %v1994
    %v2022 = vrsqrt.pop %v2021
    %v2023 = vmul.f32 %v2021, %v2022
    %vm2024 = vcmp.eq.f32.partialorder %v2021, inf
    %v2025 = vsel %vm2024, %v2021, %v2023
    %vm2026 = vcmp.eq.f32.partialorder %v2021, 0.0
    %v2027 = vand.u32 %v2021, 2147483648
    %v2028 = vsel %vm2026, %v2027, %v2025
    %vm2029 = vcmask 1040384
    %v2030 = vsel %vm2029, %v1984, %v2011
    %v2031 = vsel %vm2029, %v2002, %v2028
    %v2032 = vld [vmem:[%s16] sm:$0xff]
    %v2033 = vld [vmem:[%s16 + $0x8] sm:$0xff]
    %v2034 = vld [vmem:[%s16 + $0x10] sm:$0xff]
    %v2035 = vld [vmem:[%s16 + $0x18] sm:$0xff]
    %v2036 = vld [vmem:[%s17] sm:$0xff]
    %v2037 = vld [vmem:[%s17 + $0x8] sm:$0xff]
    %v2038 = vld [vmem:[%s17 + $0x10] sm:$0xff]
    %v2039 = vld [vmem:[%s17 + $0x18] sm:$0xff]
    %v2041 = vsel %vm635, %v2031, 0
    %2043 = vmatprep.subr.mxu0 0.0
    %2044 = vmatpush1.msra.mxu0 %v2036
    %2045 = vmatprep.subr.mxu0 0.0
    %2046 = vmatpush1.msra.mxu0 %v2037
    %2047 = vmatprep.subr.mxu0 0.0
    %2048 = vmatpush1.msra.mxu0 %v2038
    %2049 = vmatprep.subr.mxu0 0.0
    %2050 = vmatpush1.msra.mxu0 %v2039
    %2051 = vmatprep.subr.mxu0 0.0
    %2052 = vmatpush1.msra.mxu0 0.0
    %2053 = vmatprep.subr.mxu0 0.0
    %2054 = vmatpush1.msra.mxu0 0.0
    %2055 = vmatprep.subr.mxu0 0.0
    %2056 = vmatpush1.msra.mxu0 0.0
    %2057 = vmatprep.subr.mxu0 0.0
    %2058 = vmatpush1.msra.mxu0 0.0
    %2059 = vmatprep.subr.mxu0 0.0
    %2060 = vmatpush1.msra.mxu0 0.0
    %2061 = vmatprep.subr.mxu0 0.0
    %2062 = vmatpush1.msra.mxu0 0.0
    %2063 = vmatprep.subr.mxu0 0.0
    %2064 = vmatpush1.msra.mxu0 0.0
    %2065 = vmatprep.subr.mxu0 0.0
    %2066 = vmatpush1.msra.mxu0 0.0
    %2067 = vmatprep.subr.mxu0 0.0
    %2068 = vmatpush1.msra.mxu0 0.0
    %2069 = vmatprep.subr.mxu0 0.0
    %2070 = vmatpush1.msra.mxu0 0.0
    %2071 = vmatprep.subr.mxu0 0.0
    %2072 = vmatpush1.msra.mxu0 0.0
    %2073 = vmatprep.subr.mxu0 0.0
    %2074 = vmatpush1.msra.mxu0 0.0
    %2075 = vmatprep.subr.mxu0 0.0
    %2076 = vmatpush1.msra.mxu0 0.0
    %2077 = vmatprep.subr.mxu0 0.0
    %2078 = vmatpush1.msra.mxu0 0.0
    %2079 = vmatprep.subr.mxu0 0.0
    %2080 = vmatpush1.msra.mxu0 0.0
    %2081 = vmatprep.subr.mxu0 0.0
    %2082 = vmatpush1.msra.mxu0 0.0
    %2083 = vmatprep.subr.mxu0 0.0
    %2084 = vmatpush1.msra.mxu0 0.0
    %2085 = vmatprep.subr.mxu0 0.0
    %2086 = vmatpush1.msra.mxu0 0.0
    %2087 = vmatprep.subr.mxu0 0.0
    %2088 = vmatpush1.msra.mxu0 0.0
    %2089 = vmatprep.subr.mxu0 0.0
    %2090 = vmatpush1.msra.mxu0 0.0
    %2091 = vmatprep.subr.mxu0 0.0
    %2092 = vmatpush1.msra.mxu0 0.0
    %2093 = vmatprep.subr.mxu0 0.0
    %2094 = vmatpush1.msra.mxu0 0.0
    %2095 = vmatprep.subr.mxu0 0.0
    %2096 = vmatpush1.msra.mxu0 0.0
    %2097 = vmatprep.subr.mxu0 0.0
    %2098 = vmatpush1.msra.mxu0 0.0
    %2099 = vmatprep.subr.mxu0 0.0
    %2100 = vmatpush1.msra.mxu0 0.0
    %2101 = vmatprep.subr.mxu0 0.0
    %2102 = vmatpush1.msra.mxu0 0.0
    %2103 = vmatprep.subr.mxu0 0.0
    %2104 = vmatpush1.msra.mxu0 0.0
    %2105 = vmatprep.subr.mxu0 0.0
    %2106 = vmatpush1.msra.mxu0 0.0
    %2107 = vmatprep.mubr.f32.mxu0 0.0
    %2108 = vmatmul.mubr.f32.gmra.mrb[0].mxu0 %v2041
    %v2109 = vpop.f32.mrb[0].mxu0
    %v2110 = vadd.f32 0.0, %v2109
    %v2111 = vpop.f32.mrb[0].mxu0
    %2112 = vdwg.mxu0
    %v2114 = vsel %vm635, %v2030, 0
    %2116 = vmatprep.subr.mxu0 0.0
    %2117 = vmatpush1.msra.mxu0 %v2032
    %2118 = vmatprep.subr.mxu0 0.0
    %2119 = vmatpush1.msra.mxu0 %v2033
    %2120 = vmatprep.subr.mxu0 0.0
    %2121 = vmatpush1.msra.mxu0 %v2034
    %2122 = vmatprep.subr.mxu0 0.0
    %2123 = vmatpush1.msra.mxu0 %v2035
    %2124 = vmatprep.subr.mxu0 0.0
    %2125 = vmatpush1.msra.mxu0 0.0
    %2126 = vmatprep.subr.mxu0 0.0
    %2127 = vmatpush1.msra.mxu0 0.0
    %2128 = vmatprep.subr.mxu0 0.0
    %2129 = vmatpush1.msra.mxu0 0.0
    %2130 = vmatprep.subr.mxu0 0.0
    %2131 = vmatpush1.msra.mxu0 0.0
    %2132 = vmatprep.subr.mxu0 0.0
    %2133 = vmatpush1.msra.mxu0 0.0
    %2134 = vmatprep.subr.mxu0 0.0
    %2135 = vmatpush1.msra.mxu0 0.0
    %2136 = vmatprep.subr.mxu0 0.0
    %2137 = vmatpush1.msra.mxu0 0.0
    %2138 = vmatprep.subr.mxu0 0.0
    %2139 = vmatpush1.msra.mxu0 0.0
    %2140 = vmatprep.subr.mxu0 0.0
    %2141 = vmatpush1.msra.mxu0 0.0
    %2142 = vmatprep.subr.mxu0 0.0
    %2143 = vmatpush1.msra.mxu0 0.0
    %2144 = vmatprep.subr.mxu0 0.0
    %2145 = vmatpush1.msra.mxu0 0.0
    %2146 = vmatprep.subr.mxu0 0.0
    %2147 = vmatpush1.msra.mxu0 0.0
    %2148 = vmatprep.subr.mxu0 0.0
    %2149 = vmatpush1.msra.mxu0 0.0
    %2150 = vmatprep.subr.mxu0 0.0
    %2151 = vmatpush1.msra.mxu0 0.0
    %2152 = vmatprep.subr.mxu0 0.0
    %2153 = vmatpush1.msra.mxu0 0.0
    %2154 = vmatprep.subr.mxu0 0.0
    %2155 = vmatpush1.msra.mxu0 0.0
    %2156 = vmatprep.subr.mxu0 0.0
    %2157 = vmatpush1.msra.mxu0 0.0
    %2158 = vmatprep.subr.mxu0 0.0
    %2159 = vmatpush1.msra.mxu0 0.0
    %2160 = vmatprep.subr.mxu0 0.0
    %2161 = vmatpush1.msra.mxu0 0.0
    %2162 = vmatprep.subr.mxu0 0.0
    %2163 = vmatpush1.msra.mxu0 0.0
    %2164 = vmatprep.subr.mxu0 0.0
    %2165 = vmatpush1.msra.mxu0 0.0
    %2166 = vmatprep.subr.mxu0 0.0
    %2167 = vmatpush1.msra.mxu0 0.0
    %2168 = vmatprep.subr.mxu0 0.0
    %2169 = vmatpush1.msra.mxu0 0.0
    %2170 = vmatprep.subr.mxu0 0.0
    %2171 = vmatpush1.msra.mxu0 0.0
    %2172 = vmatprep.subr.mxu0 0.0
    %2173 = vmatpush1.msra.mxu0 0.0
    %2174 = vmatprep.subr.mxu0 0.0
    %2175 = vmatpush1.msra.mxu0 0.0
    %2176 = vmatprep.subr.mxu0 0.0
    %2177 = vmatpush1.msra.mxu0 0.0
    %2178 = vmatprep.subr.mxu0 0.0
    %2179 = vmatpush1.msra.mxu0 0.0
    %2180 = vmatprep.mubr.f32.mxu0 0.0
    %2181 = vmatmul.mubr.f32.gmra.mrb[0].mxu0 %v2114
    %v2182 = vpop.f32.mrb[0].mxu0
    %v2183 = vadd.f32 %v2110, %v2182
    %v2184 = vpop.f32.mrb[0].mxu0
    %2185 = vdwg.mxu0
    %v2186 = vld [vmem:[%s18] sm:$0x1]
    %v2188 = vlaneseq
    %v2189 = vshrl.u32 %v2188, 7
    %v2190 = vsub.s32 0, %v2189
    %v2191 = vrot.slane %v2186, %v2190
    %v2193 = vadd.f32 %v2183, %v2191
    %v2194 = vmul.f32 %v2193, 0.2
    %v2195 = vmax.f32 %v2193, %v2194
    %v2196 = vld [vmem:[%s19] sm:$0xff]
    %v2197 = vld [vmem:[%s19 + $0x8] sm:$0xff]
    %v2198 = vld [vmem:[%s19 + $0x10] sm:$0xff]
    %v2199 = vld [vmem:[%s19 + $0x18] sm:$0xff]
    %v2200 = vld [vmem:[%s19 + $0x20] sm:$0xff]
    %v2201 = vld [vmem:[%s19 + $0x28] sm:$0xff]
    %v2202 = vld [vmem:[%s19 + $0x30] sm:$0xff]
    %v2203 = vld [vmem:[%s19 + $0x38] sm:$0xff]
    %v2204 = vld [vmem:[%s20] sm:$0x1]
    %v2206 = vlaneseq
    %v2207 = vshrl.u32 %v2206, 7
    %v2208 = vsub.s32 0, %v2207
    %v2209 = vrot.slane %v2204, %v2208
    %v2212 = vsel %vm564, %v2195, 0
    %2214 = vmatprep.subr.mxu0 0.0
    %2215 = vmatpush1.msra.mxu0 %v2196
    %2216 = vmatprep.subr.mxu0 0.0
    %2217 = vmatpush1.msra.mxu0 %v2197
    %2218 = vmatprep.subr.mxu0 0.0
    %2219 = vmatpush1.msra.mxu0 %v2198
    %2220 = vmatprep.subr.mxu0 0.0
    %2221 = vmatpush1.msra.mxu0 %v2199
    %2222 = vmatprep.subr.mxu0 0.0
    %2223 = vmatpush1.msra.mxu0 %v2200
    %2224 = vmatprep.subr.mxu0 0.0
    %2225 = vmatpush1.msra.mxu0 %v2201
    %2226 = vmatprep.subr.mxu0 0.0
    %2227 = vmatpush1.msra.mxu0 %v2202
    %2228 = vmatprep.subr.mxu0 0.0
    %2229 = vmatpush1.msra.mxu0 %v2203
    %2230 = vmatprep.subr.mxu0 0.0
    %2231 = vmatpush1.msra.mxu0 0.0
    %2232 = vmatprep.subr.mxu0 0.0
    %2233 = vmatpush1.msra.mxu0 0.0
    %2234 = vmatprep.subr.mxu0 0.0
    %2235 = vmatpush1.msra.mxu0 0.0
    %2236 = vmatprep.subr.mxu0 0.0
    %2237 = vmatpush1.msra.mxu0 0.0
    %2238 = vmatprep.subr.mxu0 0.0
    %2239 = vmatpush1.msra.mxu0 0.0
    %2240 = vmatprep.subr.mxu0 0.0
    %2241 = vmatpush1.msra.mxu0 0.0
    %2242 = vmatprep.subr.mxu0 0.0
    %2243 = vmatpush1.msra.mxu0 0.0
    %2244 = vmatprep.subr.mxu0 0.0
    %2245 = vmatpush1.msra.mxu0 0.0
    %2246 = vmatprep.subr.mxu0 0.0
    %2247 = vmatpush1.msra.mxu0 0.0
    %2248 = vmatprep.subr.mxu0 0.0
    %2249 = vmatpush1.msra.mxu0 0.0
    %2250 = vmatprep.subr.mxu0 0.0
    %2251 = vmatpush1.msra.mxu0 0.0
    %2252 = vmatprep.subr.mxu0 0.0
    %2253 = vmatpush1.msra.mxu0 0.0
    %2254 = vmatprep.subr.mxu0 0.0
    %2255 = vmatpush1.msra.mxu0 0.0
    %2256 = vmatprep.subr.mxu0 0.0
    %2257 = vmatpush1.msra.mxu0 0.0
    %2258 = vmatprep.subr.mxu0 0.0
    %2259 = vmatpush1.msra.mxu0 0.0
    %2260 = vmatprep.subr.mxu0 0.0
    %2261 = vmatpush1.msra.mxu0 0.0
    %2262 = vmatprep.subr.mxu0 0.0
    %2263 = vmatpush1.msra.mxu0 0.0
    %2264 = vmatprep.subr.mxu0 0.0
    %2265 = vmatpush1.msra.mxu0 0.0
    %2266 = vmatprep.subr.mxu0 0.0
    %2267 = vmatpush1.msra.mxu0 0.0
    %2268 = vmatprep.subr.mxu0 0.0
    %2269 = vmatpush1.msra.mxu0 0.0
    %2270 = vmatprep.subr.mxu0 0.0
    %2271 = vmatpush1.msra.mxu0 0.0
    %2272 = vmatprep.subr.mxu0 0.0
    %2273 = vmatpush1.msra.mxu0 0.0
    %2274 = vmatprep.subr.mxu0 0.0
    %2275 = vmatpush1.msra.mxu0 0.0
    %2276 = vmatprep.subr.mxu0 0.0
    %2277 = vmatpush1.msra.mxu0 0.0
    %2278 = vmatprep.mubr.f32.mxu0 0.0
    %2279 = vmatmul.mubr.f32.gmra.mrb[0].mxu0 %v2212
    %v2280 = vpop.f32.mrb[0].mxu0
    %v2281 = vadd.f32 %v2209, %v2280
    %v2282 = vpop.f32.mrb[0].mxu0
    %2283 = vdwg.mxu0
    %v2284 = vmul.f32 %v2281, 0.2
    %v2285 = vmax.f32 %v2281, %v2284
    %v2286 = vld [vmem:[%s21] sm:$0xff]
    %v2287 = vld [vmem:[%s21 + $0x8] sm:$0xff]
    %v2288 = vld [vmem:[#allocation2] sm:$0x1]
    %v2290 = vlaneseq
    %v2291 = vshrl.u32 %v2290, 7
    %v2292 = vsub.s32 0, %v2291
    %v2293 = vrot.slane %v2288, %v2292
    %v2296 = vsel %vm835, %v2285, 0
    %2298 = vmatprep.subr.mxu0 0.0
    %2299 = vmatpush1.msra.mxu0 %v2286
    %2300 = vmatprep.subr.mxu0 0.0
    %2301 = vmatpush1.msra.mxu0 %v2287
    %2302 = vmatprep.subr.mxu0 0.0
    %2303 = vmatpush1.msra.mxu0 0.0
    %2304 = vmatprep.subr.mxu0 0.0
    %2305 = vmatpush1.msra.mxu0 0.0
    %2306 = vmatprep.subr.mxu0 0.0
    %2307 = vmatpush1.msra.mxu0 0.0
    %2308 = vmatprep.subr.mxu0 0.0
    %2309 = vmatpush1.msra.mxu0 0.0
    %2310 = vmatprep.subr.mxu0 0.0
    %2311 = vmatpush1.msra.mxu0 0.0
    %2312 = vmatprep.subr.mxu0 0.0
    %2313 = vmatpush1.msra.mxu0 0.0
    %2314 = vmatprep.subr.mxu0 0.0
    %2315 = vmatpush1.msra.mxu0 0.0
    %2316 = vmatprep.subr.mxu0 0.0
    %2317 = vmatpush1.msra.mxu0 0.0
    %2318 = vmatprep.subr.mxu0 0.0
    %2319 = vmatpush1.msra.mxu0 0.0
    %2320 = vmatprep.subr.mxu0 0.0
    %2321 = vmatpush1.msra.mxu0 0.0
    %2322 = vmatprep.subr.mxu0 0.0
    %2323 = vmatpush1.msra.mxu0 0.0
    %2324 = vmatprep.subr.mxu0 0.0
    %2325 = vmatpush1.msra.mxu0 0.0
    %2326 = vmatprep.subr.mxu0 0.0
    %2327 = vmatpush1.msra.mxu0 0.0
    %2328 = vmatprep.subr.mxu0 0.0
    %2329 = vmatpush1.msra.mxu0 0.0
    %2330 = vmatprep.subr.mxu0 0.0
    %2331 = vmatpush1.msra.mxu0 0.0
    %2332 = vmatprep.subr.mxu0 0.0
    %2333 = vmatpush1.msra.mxu0 0.0
    %2334 = vmatprep.subr.mxu0 0.0
    %2335 = vmatpush1.msra.mxu0 0.0
    %2336 = vmatprep.subr.mxu0 0.0
    %2337 = vmatpush1.msra.mxu0 0.0
    %2338 = vmatprep.subr.mxu0 0.0
    %2339 = vmatpush1.msra.mxu0 0.0
    %2340 = vmatprep.subr.mxu0 0.0
    %2341 = vmatpush1.msra.mxu0 0.0
    %2342 = vmatprep.subr.mxu0 0.0
    %2343 = vmatpush1.msra.mxu0 0.0
    %2344 = vmatprep.subr.mxu0 0.0
    %2345 = vmatpush1.msra.mxu0 0.0
    %2346 = vmatprep.subr.mxu0 0.0
    %2347 = vmatpush1.msra.mxu0 0.0
    %2348 = vmatprep.subr.mxu0 0.0
    %2349 = vmatpush1.msra.mxu0 0.0
    %2350 = vmatprep.subr.mxu0 0.0
    %2351 = vmatpush1.msra.mxu0 0.0
    %2352 = vmatprep.subr.mxu0 0.0
    %2353 = vmatpush1.msra.mxu0 0.0
    %2354 = vmatprep.subr.mxu0 0.0
    %2355 = vmatpush1.msra.mxu0 0.0
    %2356 = vmatprep.subr.mxu0 0.0
    %2357 = vmatpush1.msra.mxu0 0.0
    %2358 = vmatprep.subr.mxu0 0.0
    %2359 = vmatpush1.msra.mxu0 0.0
    %2360 = vmatprep.subr.mxu0 0.0
    %2361 = vmatpush1.msra.mxu0 0.0
    %2362 = vmatprep.mubr.f32.mxu0 0.0
    %2363 = vmatmul.mubr.f32.gmra.mrb[0].mxu0 %v2296
    %v2364 = vpop.f32.mrb[0].mxu0
    %v2365 = vadd.f32 %v2293, %v2364
    %v2366 = vpop.f32.mrb[0].mxu0
    %2367 = vdwg.mxu0
    %v2368 = vsub.f32 0.0, %v2365
    %v2369 = vmul.f32 %v2368, 1.442695
    %v2370 = vpow.pop %v2369
    %v2371 = vadd.f32 %v2370, 1.0
    %v2372 = vrcp.pop %v2371
    %vm2373 = vcmask 0
    %2374 = vst.msk [vmem:[#allocation5] sm:$0x1] %vm2373, %v2372
    %vm2375 = vcmask 1025
    %2376 = vst.msk [vmem:[#allocation7 - $0x1] sm:$0x2] %vm2375, %v2372
    // Predicated region
    $region94: #{aae_forward.1} parent=1 // pred_check
      _
    $region95: #{aae_forward.1} parent=1 // pred_check_branch
      %2378 = sbr.rel (0) target = $region97
    $region96: #{aae_forward.1} parent=1 // pred_region
      _
    $region97: #{aae_forward.1} parent=1 // pred_fallthru
      _
    // Predicated region
    $region98: #{aae_forward.1} parent=1 // pred_check
      _
    $region99: #{aae_forward.1} parent=1 // pred_check_branch
      %2380 = sbr.rel (0) target = $region101
    $region100: #{aae_forward.1} parent=1 // pred_region
      _
    $region101: #{aae_forward.1} parent=1 // pred_fallthru
      _
    // Predicated region
    $region102: #{aae_forward.1} parent=1 // pred_check
      _
    $region103: #{aae_forward.1} parent=1 // pred_check_branch
      %2382 = sbr.rel (0) target = $region105
    $region104: #{aae_forward.1} parent=1 // pred_region
      %s2384 = ssub.s32 64, 64
      %2385 = vsyncadd [#allocation4], %s2384
      %s2387 = sshll.u32 [#allocation3], 4
      %s2388 = int_to_ptr.vmem [resolvable:$true] %s2387
      %2390 = dma.vmem_to_hbm [thread:$0]  %s2388, 64, %s25, [#allocation4]
    $region105: #{aae_forward.1} parent=1 // pred_fallthru
      _
    // Predicated region
    $region106: #{aae_forward.1} parent=1 // pred_check
      _
    $region107: #{aae_forward.1} parent=1 // pred_check_branch
      %2392 = sbr.rel (0) target = $region109
    $region108: #{aae_forward.1} parent=1 // pred_region
      %s2394 = ssub.s32 16, 16
      %2395 = vsyncadd [#allocation6], %s2394
      %s2397 = sshll.u32 [#allocation5], 4
      %s2398 = int_to_ptr.vmem [resolvable:$true] %s2397
      %2400 = dma.vmem_to_hbm [thread:$0]  %s2398, 16, %s26, [#allocation6]
    $region109: #{aae_forward.1} parent=1 // pred_fallthru
      _
    // Predicated region
    $region110: #{aae_forward.1} parent=1 // pred_check
      _
    $region111: #{aae_forward.1} parent=1 // pred_check_branch
      %2402 = sbr.rel (0) target = $region113
    $region112: #{aae_forward.1} parent=1 // pred_region
      %s2404 = ssub.s32 16, 16
      %2405 = vsyncadd [#allocation6], %s2404
      %s2407 = sshll.u32 [#allocation7], 4
      %s2408 = int_to_ptr.vmem [resolvable:$true] %s2407
      %2410 = dma.vmem_to_hbm [thread:$0]  %s2408, 16, %s27, [#allocation6]
    $region113: #{aae_forward.1} parent=1 // pred_fallthru
      _
    // Predicated region
    $region114: #{aae_forward.1} parent=1 // pred_check
      _
    $region115: #{aae_forward.1} parent=1 // pred_check_branch
      %2412 = sbr.rel (0) target = $region117
    $region116: #{aae_forward.1} parent=1 // pred_region
      _
    $region117: #{aae_forward.1} parent=1 // pred_fallthru
      _
    // Predicated region
    $region118: #{aae_forward.1} parent=1 // pred_check
      _
    $region119: #{aae_forward.1} parent=1 // pred_check_branch
      %2414 = sbr.rel (0) target = $region121
    $region120: #{aae_forward.1} parent=1 // pred_region
      _
    $region121: #{aae_forward.1} parent=1 // pred_fallthru
      _
    // Predicated region
    $region122: #{aae_forward.1} parent=1 // pred_check
      _
    $region123: #{aae_forward.1} parent=1 // pred_check_branch
      %2416 = sbr.rel (0) target = $region125
    $region124: #{aae_forward.1} parent=1 // pred_region
      %2417 = dma.done [#allocation4], 64
    $region125: #{aae_forward.1} parent=1 // pred_fallthru
      _
    // Predicated region
    $region126: #{aae_forward.1} parent=1 // pred_check
      _
    $region127: #{aae_forward.1} parent=1 // pred_check_branch
      %2419 = sbr.rel (0) target = $region129
    $region128: #{aae_forward.1} parent=1 // pred_region
      %2420 = dma.done [#allocation6], 16
    $region129: #{aae_forward.1} parent=1 // pred_fallthru
      _
    // Predicated region
    $region130: #{aae_forward.1} parent=1 // pred_check
      _
    $region131: #{aae_forward.1} parent=1 // pred_check_branch
      %2422 = sbr.rel (0) target = $region133
    $region132: #{aae_forward.1} parent=1 // pred_region
      %2423 = dma.done [#allocation6], 16
    $region133: #{aae_forward.1} parent=1 // pred_fallthru
      _
    %2424 = vsyncpa [#allocation4], 1
    %2425 = vsyncpa [#allocation6], 1

</llo_original>
